<compile_context>
chip_gen: v7x
topology: tpu7x:2x2x1
jax: 0.10.0
libtpu: 0.0.40
codegen_flags: <defaults>
</compile_context>

<pallas_src>
import jax
import jax.numpy as jnp
from jax.experimental import pallas as pl
from jax.experimental.pallas import tpu as pltpu


def attentive_pooling_kernel(x_ref, w1_ref, b1_ref, w2_ref, b2_ref,
                             exp_ref, w3_ref, b3_ref, o_ref):
    # x tile is lane-dense: (tb, N*C).
    x2d = x_ref[...].astype(jnp.float32)

    # score_fn[0..1]: Linear(C, H) applied to all N neighbors at once via a
    # block-diagonal weight -> one MXU matmul with K = N*C, N = N*H.
    h = jnp.dot(x2d, w1_ref[...],
                preferred_element_type=jnp.float32) + b1_ref[...]
    h = jnp.maximum(h, 0.0)                                     # (tb, N*H)

    # score_fn[2]: Linear(H, 1) per neighbor via block-diagonal weight ->
    # per-neighbor scores land on the lane axis.
    s = jnp.dot(h, w2_ref[...],
                preferred_element_type=jnp.float32) + b2_ref[...]  # (tb, N)

    # softmax over neighbors == lane-axis softmax (dense vregs).
    m = jnp.max(s, axis=-1, keepdims=True)                      # (tb, 1)
    e = jnp.exp(s - m)                                          # (tb, N)
    d = jnp.sum(e, axis=-1, keepdims=True)                      # (tb, 1)
    a = e * pl.reciprocal(d, approx=False)                      # (tb, N)

    # Broadcast attention back over channels with a one-hot expand matmul
    # (MXU), then the neighbor-sum + output Linear fused as one matmul
    # against tile_N(W3).
    a_rep = jnp.dot(a, exp_ref[...],
                    preferred_element_type=jnp.float32)         # (tb, N*C)
    out = jnp.dot(x2d * a_rep, w3_ref[...],
                  preferred_element_type=jnp.float32) + b3_ref[...]  # (tb, C_out)
    o_ref[...] = jnp.maximum(out, 0.0).astype(o_ref.dtype)


def _round_up(v, m):
    return ((v + m - 1) // m) * m


def attentive_pooling(x, w1, b1, w2, b2, w3, b3, *, tb=256):
    """x: (B, N, C); w1: (C, H); b1: (H,); w2: (H, 1); b2: (1,);
    w3: (C, C_out); b3: (C_out,). Returns (B, C_out) float32."""
    B, N, C = x.shape
    H = w1.shape[1]
    C_out = w3.shape[1]
    NC, NH = N * C, N * H

    # Free contiguous reshape (no HBM copy): lane-dense x slab.
    x2d = x.reshape(B, NC)

    # Precompute block-diagonal / tiled parameters once (tiny, ~0.6 MiB f32).
    eye_n = jnp.eye(N, dtype=jnp.float32)
    w1_bd = jnp.kron(eye_n, w1.astype(jnp.float32))             # (N*C, N*H)
    b1_rep = jnp.tile(b1.astype(jnp.float32), N).reshape(1, NH)  # (1, N*H)
    w2_bd = jnp.kron(eye_n, w2.astype(jnp.float32))             # (N*H, N)
    expand = jnp.kron(eye_n, jnp.ones((1, C), jnp.float32))     # (N, N*C)
    w3_rep = jnp.tile(w3.astype(jnp.float32), (N, 1))           # (N*C, C_out)

    # Batch tile: multiple of 8, and small enough that the grid has >= 2
    # steps (so v7x's two TensorCores both get work).
    tb = max(8, min(tb, _round_up(pl.cdiv(B, 2), 8)))
    tb = min(tb, _round_up(B, 8))
    grid = (pl.cdiv(B, tb),)

    # VMEM budget from the actual footprint (double-buffered tiles + weights
    # + live f32 intermediates), with headroom; clamped for v7x's 64 MiB core.
    itemsize = jnp.dtype(x.dtype).itemsize
    weight_elems = NC * NH + NH + NH * N + 1 + N * NC + NC * C_out + C_out
    footprint = (2 * tb * NC * itemsize          # x tile, double buffered
                 + 2 * tb * C_out * 4            # out tile, double buffered
                 + 2 * 4 * weight_elems          # resident weights
                 + 4 * tb * (2 * NC + NH + 256)) # f32 intermediates
    vmem_limit = int(min(max(2 * footprint, 16 << 20), 48 << 20))

    out = pl.pallas_call(
        attentive_pooling_kernel,
        out_shape=jax.ShapeDtypeStruct((B, C_out), jnp.float32),
        grid_spec=pltpu.PrefetchScalarGridSpec(
            num_scalar_prefetch=0,
            grid=grid,
            in_specs=[
                pl.BlockSpec((tb, NC),     lambda i: (i, 0)),   # x (lane-dense)
                pl.BlockSpec((NC, NH),     lambda i: (0, 0)),   # blockdiag(W1)
                pl.BlockSpec((1, NH),      lambda i: (0, 0)),   # tiled b1
                pl.BlockSpec((NH, N),      lambda i: (0, 0)),   # blockdiag(w2)
                pl.BlockSpec((1, 1),       lambda i: (0, 0)),   # b2
                pl.BlockSpec((N, NC),      lambda i: (0, 0)),   # expand one-hot
                pl.BlockSpec((NC, C_out),  lambda i: (0, 0)),   # tiled W3
                pl.BlockSpec((1, C_out),   lambda i: (0, 0)),   # b3
            ],
            out_specs=pl.BlockSpec((tb, C_out), lambda i: (i, 0)),
        ),
        compiler_params=pltpu.CompilerParams(
            dimension_semantics=("parallel",),
            vmem_limit_bytes=vmem_limit,
        ),
    )(x2d,
      w1_bd, b1_rep,
      w2_bd, b2.astype(jnp.float32).reshape(1, 1),
      expand, w3_rep, b3.astype(jnp.float32).reshape(1, C_out))

    return out


def reference(x, w1, b1, w2, b2, w3, b3):
    # Pure-JAX reference mirroring the PyTorch forward.
    h = jnp.maximum(x @ w1 + b1, 0.0)
    s = h @ w2 + b2                         # (B, N, 1)
    s = jax.nn.softmax(s, axis=1)
    feats = jnp.sum(x * s, axis=1)          # (B, C)
    return jnp.maximum(feats @ w3 + b3, 0.0)


if __name__ == "__main__":
    # Small but representative: many "batch" rows (points), N=16 neighbors.
    B, N = 200, 16
    in_channels, out_channels = 32, 16
    hidden = in_channels // 2

    key = jax.random.PRNGKey(0)
    kx, k1, k2, k3, k4, k5, k6 = jax.random.split(key, 7)

    x = jax.random.normal(kx, (B, N, in_channels), dtype=jnp.float32)

    # Deterministic parameter init (uniform +-1/sqrt(fan_in), like torch defaults).
    def uinit(k, shape, fan_in):
        bound = 1.0 / float(fan_in) ** 0.5
        return jax.random.uniform(k, shape, jnp.float32, -bound, bound)

    w1 = uinit(k1, (in_channels, hidden), in_channels)
    b1 = uinit(k2, (hidden,), in_channels)
    w2 = uinit(k3, (hidden, 1), hidden)
    b2 = uinit(k4, (1,), hidden)
    w3 = uinit(k5, (in_channels, out_channels), in_channels)
    b3 = uinit(k6, (out_channels,), in_channels)

    out = attentive_pooling(x, w1, b1, w2, b2, w3, b3)
    out = jax.block_until_ready(out)

    ref = reference(x, w1, b1, w2, b2, w3, b3)
    assert out.shape == (B, out_channels)
    max_err = float(jnp.max(jnp.abs(out - ref)))
    assert max_err < 1e-4, f"max err {max_err}"

    print("KERNEL_OK")
</pallas_src>

<mosaic_0001>
module attributes {stable_mosaic.version = 11 : i64} {
  func.func @attentive_pooling_kernel(%arg0: i32, %arg1: memref<104x512xf32, #tpu.memory_space<vmem>>, %arg2: memref<512x256xf32, #tpu.memory_space<vmem>>, %arg3: memref<1x256xf32, #tpu.memory_space<vmem>>, %arg4: memref<256x16xf32, #tpu.memory_space<vmem>>, %arg5: memref<1x1xf32, #tpu.memory_space<vmem>>, %arg6: memref<16x512xf32, #tpu.memory_space<vmem>>, %arg7: memref<512x16xf32, #tpu.memory_space<vmem>>, %arg8: memref<1x16xf32, #tpu.memory_space<vmem>>, %arg9: memref<104x16xf32, #tpu.memory_space<vmem>>) attributes {dimension_semantics = [#tpu.dimension_semantics<parallel>], iteration_bounds = array<i64: 2>, scalar_prefetch = 0 : i64, scratch_operands = 0 : i64, tpu.core_type = #tpu.core_type<tc>, window_params = [{transform_indices = @transform_0, window_bounds = array<i64: 104, 512>}, {pipeline_mode = #tpu.pipeline_mode<synchronous>, transform_indices = @transform_1, window_bounds = array<i64: 512, 256>}, {pipeline_mode = #tpu.pipeline_mode<synchronous>, transform_indices = @transform_2, window_bounds = array<i64: 1, 256>}, {pipeline_mode = #tpu.pipeline_mode<synchronous>, transform_indices = @transform_3, window_bounds = array<i64: 256, 16>}, {pipeline_mode = #tpu.pipeline_mode<synchronous>, transform_indices = @transform_4, window_bounds = array<i64: 1, 1>}, {pipeline_mode = #tpu.pipeline_mode<synchronous>, transform_indices = @transform_5, window_bounds = array<i64: 16, 512>}, {pipeline_mode = #tpu.pipeline_mode<synchronous>, transform_indices = @transform_6, window_bounds = array<i64: 512, 16>}, {pipeline_mode = #tpu.pipeline_mode<synchronous>, transform_indices = @transform_7, window_bounds = array<i64: 1, 16>}, {transform_indices = @transform_8, window_bounds = array<i64: 104, 16>}]} {
    %c0 = arith.constant 0 : index
    %c0_0 = arith.constant 0 : index
    %0 = vector.load %arg1[%c0, %c0_0] : memref<104x512xf32, #tpu.memory_space<vmem>>, vector<104x512xf32>
    %c0_1 = arith.constant 0 : index
    %c0_2 = arith.constant 0 : index
    %1 = vector.load %arg2[%c0_1, %c0_2] : memref<512x256xf32, #tpu.memory_space<vmem>>, vector<512x256xf32>
    %cst = arith.constant dense<0.000000e+00> : vector<104x256xf32>
    %2 = tpu.matmul %0, %1, %cst {dimension_numbers = #tpu.dot_dimension_numbers<[1], [0], [0], [1], [0, 0, 1, 1], [], []>} : vector<104x512xf32>, vector<512x256xf32>, vector<104x256xf32> -> vector<104x256xf32>
    %c0_3 = arith.constant 0 : index
    %c0_4 = arith.constant 0 : index
    %3 = vector.load %arg3[%c0_3, %c0_4] : memref<1x256xf32, #tpu.memory_space<vmem>>, vector<1x256xf32>
    %4 = vector.broadcast %3 : vector<1x256xf32> to vector<104x256xf32>
    %5 = arith.addf %2, %4 : vector<104x256xf32>
    %cst_5 = arith.constant 0.000000e+00 : f32
    %6 = vector.broadcast %cst_5 : f32 to vector<104x256xf32>
    %7 = arith.maximumf %5, %6 : vector<104x256xf32>
    %c0_6 = arith.constant 0 : index
    %c0_7 = arith.constant 0 : index
    %8 = vector.load %arg4[%c0_6, %c0_7] : memref<256x16xf32, #tpu.memory_space<vmem>>, vector<256x16xf32>
    %cst_8 = arith.constant dense<0.000000e+00> : vector<104x16xf32>
    %9 = tpu.matmul %7, %8, %cst_8 {dimension_numbers = #tpu.dot_dimension_numbers<[1], [0], [0], [1], [0, 0, 1, 1], [], []>} : vector<104x256xf32>, vector<256x16xf32>, vector<104x16xf32> -> vector<104x16xf32>
    %c0_9 = arith.constant 0 : index
    %c0_10 = arith.constant 0 : index
    %10 = vector.load %arg5[%c0_9, %c0_10] : memref<1x1xf32, #tpu.memory_space<vmem>>, vector<1x1xf32>
    %11 = vector.broadcast %10 : vector<1x1xf32> to vector<104x16xf32>
    %12 = arith.addf %9, %11 : vector<104x16xf32>
    %cst_11 = arith.constant dense<0xFF800000> : vector<104xf32>
    %13 = vector.multi_reduction <maximumf>, %12, %cst_11 [1] : vector<104x16xf32> to vector<104xf32>
    %14 = vector.shape_cast %13 : vector<104xf32> to vector<104x1xf32>
    %15 = vector.broadcast %14 : vector<104x1xf32> to vector<104x16xf32>
    %16 = arith.subf %12, %15 : vector<104x16xf32>
    %17 = math.exp %16 : vector<104x16xf32>
    %cst_12 = arith.constant dense<0.000000e+00> : vector<104xf32>
    %18 = vector.multi_reduction <add>, %17, %cst_12 [1] : vector<104x16xf32> to vector<104xf32>
    %19 = vector.shape_cast %18 : vector<104xf32> to vector<104x1xf32>
    %20 = tpu.reciprocal %19 : vector<104x1xf32> -> vector<104x1xf32>
    %21 = vector.broadcast %20 : vector<104x1xf32> to vector<104x16xf32>
    %22 = arith.mulf %17, %21 : vector<104x16xf32>
    %c0_13 = arith.constant 0 : index
    %c0_14 = arith.constant 0 : index
    %23 = vector.load %arg6[%c0_13, %c0_14] : memref<16x512xf32, #tpu.memory_space<vmem>>, vector<16x512xf32>
    %cst_15 = arith.constant dense<0.000000e+00> : vector<104x512xf32>
    %24 = tpu.matmul %22, %23, %cst_15 {dimension_numbers = #tpu.dot_dimension_numbers<[1], [0], [0], [1], [0, 0, 1, 1], [], []>} : vector<104x16xf32>, vector<16x512xf32>, vector<104x512xf32> -> vector<104x512xf32>
    %25 = arith.mulf %0, %24 : vector<104x512xf32>
    %c0_16 = arith.constant 0 : index
    %c0_17 = arith.constant 0 : index
    %26 = vector.load %arg7[%c0_16, %c0_17] : memref<512x16xf32, #tpu.memory_space<vmem>>, vector<512x16xf32>
    %cst_18 = arith.constant dense<0.000000e+00> : vector<104x16xf32>
    %27 = tpu.matmul %25, %26, %cst_18 {dimension_numbers = #tpu.dot_dimension_numbers<[1], [0], [0], [1], [0, 0, 1, 1], [], []>} : vector<104x512xf32>, vector<512x16xf32>, vector<104x16xf32> -> vector<104x16xf32>
    %c0_19 = arith.constant 0 : index
    %c0_20 = arith.constant 0 : index
    %28 = vector.load %arg8[%c0_19, %c0_20] : memref<1x16xf32, #tpu.memory_space<vmem>>, vector<1x16xf32>
    %29 = vector.broadcast %28 : vector<1x16xf32> to vector<104x16xf32>
    %30 = arith.addf %27, %29 : vector<104x16xf32>
    %cst_21 = arith.constant 0.000000e+00 : f32
    %31 = vector.broadcast %cst_21 : f32 to vector<104x16xf32>
    %32 = arith.maximumf %30, %31 : vector<104x16xf32>
    %c0_22 = arith.constant 0 : index
    %c0_23 = arith.constant 0 : index
    %33 = vector.load %arg9[%c0_22, %c0_23] : memref<104x16xf32, #tpu.memory_space<vmem>>, vector<104x16xf32>
    tpu.vector_store %arg9[%c0_22, %c0_23], %32 {strides = array<i32>} : memref<104x16xf32, #tpu.memory_space<vmem>>, vector<104x16xf32>,
    return
  }
  func.func @transform_0(%arg0: i32) -> (i32, i32) {
    %c0_i32 = arith.constant 0 : i32
    %c0_i32_0 = arith.constant 0 : i32
    return %arg0, %c0_i32 : i32, i32
  }
  func.func @transform_1(%arg0: i32) -> (i32, i32) {
    %c0_i32 = arith.constant 0 : i32
    %c0_i32_0 = arith.constant 0 : i32
    %c0_i32_1 = arith.constant 0 : i32
    return %c0_i32, %c0_i32_0 : i32, i32
  }
  func.func @transform_2(%arg0: i32) -> (i32, i32) {
    %c0_i32 = arith.constant 0 : i32
    %c0_i32_0 = arith.constant 0 : i32
    %c0_i32_1 = arith.constant 0 : i32
    return %c0_i32, %c0_i32_0 : i32, i32
  }
  func.func @transform_3(%arg0: i32) -> (i32, i32) {
    %c0_i32 = arith.constant 0 : i32
    %c0_i32_0 = arith.constant 0 : i32
    %c0_i32_1 = arith.constant 0 : i32
    return %c0_i32, %c0_i32_0 : i32, i32
  }
  func.func @transform_4(%arg0: i32) -> (i32, i32) {
    %c0_i32 = arith.constant 0 : i32
    %c0_i32_0 = arith.constant 0 : i32
    %c0_i32_1 = arith.constant 0 : i32
    return %c0_i32, %c0_i32_0 : i32, i32
  }
  func.func @transform_5(%arg0: i32) -> (i32, i32) {
    %c0_i32 = arith.constant 0 : i32
    %c0_i32_0 = arith.constant 0 : i32
    %c0_i32_1 = arith.constant 0 : i32
    return %c0_i32, %c0_i32_0 : i32, i32
  }
  func.func @transform_6(%arg0: i32) -> (i32, i32) {
    %c0_i32 = arith.constant 0 : i32
    %c0_i32_0 = arith.constant 0 : i32
    %c0_i32_1 = arith.constant 0 : i32
    return %c0_i32, %c0_i32_0 : i32, i32
  }
  func.func @transform_7(%arg0: i32) -> (i32, i32) {
    %c0_i32 = arith.constant 0 : i32
    %c0_i32_0 = arith.constant 0 : i32
    %c0_i32_1 = arith.constant 0 : i32
    return %c0_i32, %c0_i32_0 : i32, i32
  }
  func.func @transform_8(%arg0: i32) -> (i32, i32) {
    %c0_i32 = arith.constant 0 : i32
    %c0_i32_0 = arith.constant 0 : i32
    return %arg0, %c0_i32 : i32, i32
  }
}

</mosaic_0001>

<llo_original>
// kernel: tpu_custom_call.1
$region0: #{tpu_custom_call.1}
  #allocation0 [shape = 'u32[]', space=smem, size = 0x4, offset = 0x4, fixed_abs, tag = 'smem constant byte address 0x4 - core index']
  #allocation1 [shape = 'u32[144,128]{1,0:T(1,128)}', space=vmem, size = 0x12000, scoped, tag = 'internal scratch']
  #allocation2 [shape = 'f32[1,1]{1,0:T(1,128)S(1)}', space=vmem, size = 0x200, scoped, tag = 'scoped memory for tpu_custom_call.1']
  %s0 = inlined_call_operand.vmem [shape: f32[200,512], index: 0, kind: input, shape index: {}]
  %s1 = inlined_call_operand.hbm [shape: f32[512,256], index: 1, kind: input, shape index: {}]
  %s2 = inlined_call_operand.vmem [shape: f32[1,256], index: 2, kind: input, shape index: {}]
  %s3 = inlined_call_operand.vmem [shape: f32[256,16], index: 3, kind: input, shape index: {}]
  %s4 = inlined_call_operand.<no memory space> [shape: f32[1,1], index: 4, kind: input, shape index: {}]
  %s5 = inlined_call_operand.hbm [shape: f32[16,512], index: 5, kind: input, shape index: {}]
  %s6 = inlined_call_operand.vmem [shape: f32[512,16], index: 6, kind: input, shape index: {}]
  %s7 = inlined_call_operand.vmem [shape: f32[1,16], index: 7, kind: input, shape index: {}]
  %s8 = inlined_call_operand.vmem [shape: f32[200,16], index: 8, kind: output, shape index: {}]
  %s9 = sld [smem:[#allocation0]]
  $region121: #{tpu_custom_call.1} parent=0
    _
  %s11 = ssub.s32 1, %s9
  %s12 = scalar_select 0, %s11, %s9
  %v13 = vstv %s4
  %14 = vst [vmem:[#allocation2] sm:$0x1] %v13
  $region1: #{tpu_custom_call.1} parent=0
    #allocation3 [shape = 'u8[524288]{0}', space=vmem, size = 0x80000, scoped, tag = 'input window, operand 1, single buffered']
    #allocation4 [shape = 's32[2]{0}', space=sflag, size = 0x8, scoped, tag = 'scoped memory for tpu_custom_call.1']
    #allocation5 [shape = 'u8[32768]{0}', space=vmem, size = 0x8000, scoped, tag = 'input window, operand 5, single buffered']
    #allocation6 [shape = 's32[1]{0}', space=sflag, size = 0x4, scoped, tag = 'scoped memory for tpu_custom_call.1']
    #allocation7 [shape = 'u8[106496]{0}', space=vmem, size = 0x1a000, scoped, tag = 'output window, operand 0']
    %15 = vsyncpa [#allocation4], 0
    %16 = vsyncpa [#allocation6], 0
    loop: start=0, step=1, limit=4
    $region2: #{tpu_custom_call.1} parent=1 // loop_pre_header
      _
    $region3: #{tpu_custom_call.1} parent=1 // loop_header
      %s18 = sphi 0, %s22
      %p19 = scmp.ge.s32.totalorder %s18, 4
      %s28 = sphi 0, %s30
      %s31 = sphi 0, %s28
      %s32 = sphi 0, %s31
      %s48 = sphi 0, %s32
      %s52 = sphi 0, %s52
      %s54 = sphi 0, %s52
      %s55 = sphi 0, %s54
      %s69 = sphi 0, %s55
      %s73 = sphi 0, %s73
      %s75 = sphi 0, %s73
      %s76 = sphi 0, %s75
      %s90 = sphi 0, %s76
      %s94 = sphi 0, %s94
      %s96 = sphi 0, %s94
      %s97 = sphi 0, %s96
      %s111 = sphi 0, %s97
      %s115 = sphi 0, %s115
      %s117 = sphi 0, %s115
      %s118 = sphi 0, %s117
      %s132 = sphi 0, %s118
      %s136 = sphi 0, %s136
      %s138 = sphi 0, %s136
      %s139 = sphi 0, %s138
      %s153 = sphi 0, %s139
      %s157 = sphi 0, %s157
      %s159 = sphi 0, %s157
      %s160 = sphi 0, %s159
      %s174 = sphi 0, %s160
      %s178 = sphi 0, %s178
      %s180 = sphi 0, %s178
      %s181 = sphi 0, %s180
      %s195 = sphi 0, %s181
      %s201 = sphi 0, %s203
      %s204 = sphi 0, %s201
      %s205 = sphi 0, %s204
      %s221 = sphi 0, %s205
    $region4: #{tpu_custom_call.1} parent=1 // loop_header_branch
      %21 = sbr.rel (%p19) target = $region8
    $region5: #{tpu_custom_call.1} parent=1 // loop_body
      %s23 = ssub.s32 %s18, 1
      %s24 = ssub.s32 %s18, 2
      %s25 = sadd.s32 %s18, 1
      %s26 = ssub.s32 %s18, %s25
      %p27 = scmp.eq.s32.totalorder %s26, 0
      %s29 = sadd.s32 %s28, 1
      %s30 = scalar_select %p27, %s28, %s29
      %p33 = pneg %p27
      %p34 = scmp.eq.s32.totalorder %s18, 1
      %p35 = por %p33, %p34
      %p36 = scmp.ne.s32.totalorder %s28, %s31
      %p37 = scmp.eq.s32.totalorder %s18, 0
      %p38 = por %p36, %p37
      %p39 = scmp.ne.s32.totalorder %s28, %s31
      %p40 = scmp.eq.s32.totalorder %s23, 1
      %p41 = por %p39, %p40
      %p42 = scmp.ne.s32.totalorder %s31, %s32
      %p43 = scmp.eq.s32.totalorder %s23, 0
      %p44 = por %p42, %p43
      %p45 = scmp.ne.s32.totalorder %s31, %s32
      %p46 = scmp.eq.s32.totalorder %s24, 1
      %p47 = por %p45, %p46
      %p49 = scmp.ne.s32.totalorder %s32, %s48
      %p50 = scmp.eq.s32.totalorder %s24, 0
      %p51 = por %p49, %p50
      %s53 = sadd.s32 %s52, 1
      %p56 = scmp.eq.s32.totalorder %s18, 1
      %p57 = scmp.ne.s32.totalorder %s52, %s54
      %p58 = scmp.eq.s32.totalorder %s18, 0
      %p59 = por %p57, %p58
      %p60 = scmp.ne.s32.totalorder %s52, %s54
      %p61 = scmp.eq.s32.totalorder %s23, 1
      %p62 = por %p60, %p61
      %p63 = scmp.ne.s32.totalorder %s54, %s55
      %p64 = scmp.eq.s32.totalorder %s23, 0
      %p65 = por %p63, %p64
      %p66 = scmp.ne.s32.totalorder %s54, %s55
      %p67 = scmp.eq.s32.totalorder %s24, 1
      %p68 = por %p66, %p67
      %p70 = scmp.ne.s32.totalorder %s55, %s69
      %p71 = scmp.eq.s32.totalorder %s24, 0
      %p72 = por %p70, %p71
      %s74 = sadd.s32 %s73, 1
      %p77 = scmp.eq.s32.totalorder %s18, 1
      %p78 = scmp.ne.s32.totalorder %s73, %s75
      %p79 = scmp.eq.s32.totalorder %s18, 0
      %p80 = por %p78, %p79
      %p81 = scmp.ne.s32.totalorder %s73, %s75
      %p82 = scmp.eq.s32.totalorder %s23, 1
      %p83 = por %p81, %p82
      %p84 = scmp.ne.s32.totalorder %s75, %s76
      %p85 = scmp.eq.s32.totalorder %s23, 0
      %p86 = por %p84, %p85
      %p87 = scmp.ne.s32.totalorder %s75, %s76
      %p88 = scmp.eq.s32.totalorder %s24, 1
      %p89 = por %p87, %p88
      %p91 = scmp.ne.s32.totalorder %s76, %s90
      %p92 = scmp.eq.s32.totalorder %s24, 0
      %p93 = por %p91, %p92
      %s95 = sadd.s32 %s94, 1
      %p98 = scmp.eq.s32.totalorder %s18, 1
      %p99 = scmp.ne.s32.totalorder %s94, %s96
      %p100 = scmp.eq.s32.totalorder %s18, 0
      %p101 = por %p99, %p100
      %p102 = scmp.ne.s32.totalorder %s94, %s96
      %p103 = scmp.eq.s32.totalorder %s23, 1
      %p104 = por %p102, %p103
      %p105 = scmp.ne.s32.totalorder %s96, %s97
      %p106 = scmp.eq.s32.totalorder %s23, 0
      %p107 = por %p105, %p106
      %p108 = scmp.ne.s32.totalorder %s96, %s97
      %p109 = scmp.eq.s32.totalorder %s24, 1
      %p110 = por %p108, %p109
      %p112 = scmp.ne.s32.totalorder %s97, %s111
      %p113 = scmp.eq.s32.totalorder %s24, 0
      %p114 = por %p112, %p113
      %s116 = sadd.s32 %s115, 1
      %p119 = scmp.eq.s32.totalorder %s18, 1
      %p120 = scmp.ne.s32.totalorder %s115, %s117
      %p121 = scmp.eq.s32.totalorder %s18, 0
      %p122 = por %p120, %p121
      %p123 = scmp.ne.s32.totalorder %s115, %s117
      %p124 = scmp.eq.s32.totalorder %s23, 1
      %p125 = por %p123, %p124
      %p126 = scmp.ne.s32.totalorder %s117, %s118
      %p127 = scmp.eq.s32.totalorder %s23, 0
      %p128 = por %p126, %p127
      %p129 = scmp.ne.s32.totalorder %s117, %s118
      %p130 = scmp.eq.s32.totalorder %s24, 1
      %p131 = por %p129, %p130
      %p133 = scmp.ne.s32.totalorder %s118, %s132
      %p134 = scmp.eq.s32.totalorder %s24, 0
      %p135 = por %p133, %p134
      %s137 = sadd.s32 %s136, 1
      %p140 = scmp.eq.s32.totalorder %s18, 1
      %p141 = scmp.ne.s32.totalorder %s136, %s138
      %p142 = scmp.eq.s32.totalorder %s18, 0
      %p143 = por %p141, %p142
      %p144 = scmp.ne.s32.totalorder %s136, %s138
      %p145 = scmp.eq.s32.totalorder %s23, 1
      %p146 = por %p144, %p145
      %p147 = scmp.ne.s32.totalorder %s138, %s139
      %p148 = scmp.eq.s32.totalorder %s23, 0
      %p149 = por %p147, %p148
      %p150 = scmp.ne.s32.totalorder %s138, %s139
      %p151 = scmp.eq.s32.totalorder %s24, 1
      %p152 = por %p150, %p151
      %p154 = scmp.ne.s32.totalorder %s139, %s153
      %p155 = scmp.eq.s32.totalorder %s24, 0
      %p156 = por %p154, %p155
      %s158 = sadd.s32 %s157, 1
      %p161 = scmp.eq.s32.totalorder %s18, 1
      %p162 = scmp.ne.s32.totalorder %s157, %s159
      %p163 = scmp.eq.s32.totalorder %s18, 0
      %p164 = por %p162, %p163
      %p165 = scmp.ne.s32.totalorder %s157, %s159
      %p166 = scmp.eq.s32.totalorder %s23, 1
      %p167 = por %p165, %p166
      %p168 = scmp.ne.s32.totalorder %s159, %s160
      %p169 = scmp.eq.s32.totalorder %s23, 0
      %p170 = por %p168, %p169
      %p171 = scmp.ne.s32.totalorder %s159, %s160
      %p172 = scmp.eq.s32.totalorder %s24, 1
      %p173 = por %p171, %p172
      %p175 = scmp.ne.s32.totalorder %s160, %s174
      %p176 = scmp.eq.s32.totalorder %s24, 0
      %p177 = por %p175, %p176
      %s179 = sadd.s32 %s178, 1
      %p182 = scmp.eq.s32.totalorder %s18, 1
      %p183 = scmp.ne.s32.totalorder %s178, %s180
      %p184 = scmp.eq.s32.totalorder %s18, 0
      %p185 = por %p183, %p184
      %p186 = scmp.ne.s32.totalorder %s178, %s180
      %p187 = scmp.eq.s32.totalorder %s23, 1
      %p188 = por %p186, %p187
      %p189 = scmp.ne.s32.totalorder %s180, %s181
      %p190 = scmp.eq.s32.totalorder %s23, 0
      %p191 = por %p189, %p190
      %p192 = scmp.ne.s32.totalorder %s180, %s181
      %p193 = scmp.eq.s32.totalorder %s24, 1
      %p194 = por %p192, %p193
      %p196 = scmp.ne.s32.totalorder %s181, %s195
      %p197 = scmp.eq.s32.totalorder %s24, 0
      %p198 = por %p196, %p197
      %s199 = ssub.s32 %s18, %s25
      %p200 = scmp.eq.s32.totalorder %s199, 0
      %s202 = sadd.s32 %s201, 1
      %s203 = scalar_select %p200, %s201, %s202
      %p206 = pneg %p200
      %p207 = scmp.eq.s32.totalorder %s18, 1
      %p208 = por %p206, %p207
      %p209 = scmp.ne.s32.totalorder %s201, %s204
      %p210 = scmp.eq.s32.totalorder %s18, 0
      %p211 = por %p209, %p210
      %p212 = scmp.ne.s32.totalorder %s201, %s204
      %p213 = scmp.eq.s32.totalorder %s23, 1
      %p214 = por %p212, %p213
      %p215 = scmp.ne.s32.totalorder %s204, %s205
      %p216 = scmp.eq.s32.totalorder %s23, 0
      %p217 = por %p215, %p216
      %p218 = scmp.ne.s32.totalorder %s204, %s205
      %p219 = scmp.eq.s32.totalorder %s24, 1
      %p220 = por %p218, %p219
      %p222 = scmp.ne.s32.totalorder %s205, %s221
      %p223 = scmp.eq.s32.totalorder %s24, 0
      %p224 = por %p222, %p223
      %p225 = scmp.le.s32.totalorder 1, %s18
      %p226 = scmp.lt.s32.totalorder %s18, 3
      %p227 = pnand %p225, %p226
      %p228 = pneg %p227
      // Predicated region
      $region9: #{tpu_custom_call.1} parent=5 // pred_check
        _
      $region10: #{tpu_custom_call.1} parent=5 // pred_check_branch
        %230 = sbr.rel (%p227) target = $region12
      $region11: #{tpu_custom_call.1} parent=5 // pred_region
        %s231 = ssub.s32 %s18, 1
        // Predicated region
        $region13: #{tpu_custom_call.1} parent=11 // pred_check
          %p232 = pneg %p65
        $region14: #{tpu_custom_call.1} parent=11 // pred_check_branch
          %234 = sbr.rel (%p232) target = $region16
        $region15: #{tpu_custom_call.1} parent=11 // pred_region
          %s236 = ssub.s32 16384, 16384
          %237 = vsyncadd [#allocation4], %s236
          %s238 = sshll.u32 [#allocation3], 4
          %s239 = int_to_ptr.vmem [resolvable:$true] %s238
          %244 = dma.hbm_to_vmem [thread:$0]  %s1, 16384, %s239, [#allocation4], 256, 256, 16
        $region16: #{tpu_custom_call.1} parent=11 // pred_fallthru
          _
        // Predicated region
        $region17: #{tpu_custom_call.1} parent=11 // pred_check
          %p245 = pneg %p86
        $region18: #{tpu_custom_call.1} parent=11 // pred_check_branch
          %247 = sbr.rel (%p245) target = $region20
        $region19: #{tpu_custom_call.1} parent=11 // pred_region
          _
        $region20: #{tpu_custom_call.1} parent=11 // pred_fallthru
          _
        // Predicated region
        $region21: #{tpu_custom_call.1} parent=11 // pred_check
          %p248 = pneg %p107
        $region22: #{tpu_custom_call.1} parent=11 // pred_check_branch
          %250 = sbr.rel (%p248) target = $region24
        $region23: #{tpu_custom_call.1} parent=11 // pred_region
          _
        $region24: #{tpu_custom_call.1} parent=11 // pred_fallthru
          _
        // Predicated region
        $region25: #{tpu_custom_call.1} parent=11 // pred_check
          %p251 = pneg %p128
        $region26: #{tpu_custom_call.1} parent=11 // pred_check_branch
          %253 = sbr.rel (%p251) target = $region28
        $region27: #{tpu_custom_call.1} parent=11 // pred_region
          _
        $region28: #{tpu_custom_call.1} parent=11 // pred_fallthru
          _
        // Predicated region
        $region29: #{tpu_custom_call.1} parent=11 // pred_check
          %p254 = pneg %p149
        $region30: #{tpu_custom_call.1} parent=11 // pred_check_branch
          %256 = sbr.rel (%p254) target = $region32
        $region31: #{tpu_custom_call.1} parent=11 // pred_region
          %s258 = ssub.s32 1024, 1024
          %259 = vsyncadd [#allocation6], %s258
          %s260 = sshll.u32 [#allocation5], 4
          %s261 = int_to_ptr.vmem [resolvable:$true] %s260
          %266 = dma.hbm_to_vmem [thread:$0]  %s5, 1024, %s261, [#allocation6], 512, 512, 32
        $region32: #{tpu_custom_call.1} parent=11 // pred_fallthru
          _
        // Predicated region
        $region33: #{tpu_custom_call.1} parent=11 // pred_check
          %p267 = pneg %p170
        $region34: #{tpu_custom_call.1} parent=11 // pred_check_branch
          %269 = sbr.rel (%p267) target = $region36
        $region35: #{tpu_custom_call.1} parent=11 // pred_region
          _
        $region36: #{tpu_custom_call.1} parent=11 // pred_fallthru
          _
        // Predicated region
        $region37: #{tpu_custom_call.1} parent=11 // pred_check
          %p270 = pneg %p191
        $region38: #{tpu_custom_call.1} parent=11 // pred_check_branch
          %272 = sbr.rel (%p270) target = $region40
        $region39: #{tpu_custom_call.1} parent=11 // pred_region
          _
        $region40: #{tpu_custom_call.1} parent=11 // pred_fallthru
          _
      $region12: #{tpu_custom_call.1} parent=5 // pred_fallthru
        _
      %p273 = scmp.lt.s32.totalorder %s18, 2
      // Predicated region
      $region41: #{tpu_custom_call.1} parent=5 // pred_check
        %p274 = pneg %p273
      $region42: #{tpu_custom_call.1} parent=5 // pred_check_branch
        %276 = sbr.rel (%p274) target = $region44
      $region43: #{tpu_custom_call.1} parent=5 // pred_region
        // Predicated region
        $region45: #{tpu_custom_call.1} parent=43 // pred_check
          %p277 = pneg %p38
        $region46: #{tpu_custom_call.1} parent=43 // pred_check_branch
          %279 = sbr.rel (%p277) target = $region48
        $region47: #{tpu_custom_call.1} parent=43 // pred_region
          %s280 = smul.u32 13, %s18
          %s281 = ssub.s32 25, %s280
          %p282 = scmp.lt.s32.totalorder %s281, 13
          %s283 = scalar_select %p282, %s281, 13
          %s284 = smul.u32 128, %s283
          %s285 = smul.u32 %s284, 4
          %p286 = scmp.lt.s32.totalorder %s280, 24
          %s287 = scalar_select %p286, %s280, 24
          %s288 = smul.addr %s287, 4
          %s289 = smul.addr %s288, 8
          %s290 = scalar_lea.vmem %s0, %s289
          %s291 = smul.u32 13, %s18
          %s292 = ssub.s32 25, %s291
          %p293 = scmp.lt.s32.totalorder %s292, 13
          %s294 = scalar_select %p293, %s292, 13
          %s295 = smul.u32 128, %s294
          %s296 = smul.u32 %s295, 4
        $region48: #{tpu_custom_call.1} parent=43 // pred_fallthru
          _
      $region44: #{tpu_custom_call.1} parent=5 // pred_fallthru
        _
      %p297 = scmp.le.s32.totalorder 1, %s18
      %p298 = scmp.lt.s32.totalorder %s18, 3
      %p299 = pnand %p297, %p298
      %p300 = pneg %p299
      // Predicated region
      $region49: #{tpu_custom_call.1} parent=5 // pred_check
        _
      $region50: #{tpu_custom_call.1} parent=5 // pred_check_branch
        %302 = sbr.rel (%p299) target = $region52
      $region51: #{tpu_custom_call.1} parent=5 // pred_region
        %s303 = ssub.s32 %s18, 1
        // Predicated region
        $region53: #{tpu_custom_call.1} parent=51 // pred_check
          %p304 = pneg %p65
        $region54: #{tpu_custom_call.1} parent=51 // pred_check_branch
          %306 = sbr.rel (%p304) target = $region56
        $region55: #{tpu_custom_call.1} parent=51 // pred_region
          %307 = dma.done [#allocation4], 16384
        $region56: #{tpu_custom_call.1} parent=51 // pred_fallthru
          _
        // Predicated region
        $region57: #{tpu_custom_call.1} parent=51 // pred_check
          %p308 = pneg %p149
        $region58: #{tpu_custom_call.1} parent=51 // pred_check_branch
          %310 = sbr.rel (%p308) target = $region60
        $region59: #{tpu_custom_call.1} parent=51 // pred_region
          %311 = dma.done [#allocation6], 1024
        $region60: #{tpu_custom_call.1} parent=51 // pred_fallthru
          _
        %s312 = smul.u32 13, %s23
        %s313 = ssub.s32 25, %s312
        %p314 = scmp.lt.s32.totalorder %s313, 13
        %s315 = scalar_select %p314, %s313, 13
        %s316 = smul.u32 128, %s315
        %s317 = smul.u32 %s316, 4
        %p318 = scmp.lt.s32.totalorder %s312, 24
        %s319 = scalar_select %p318, %s312, 24
        %s320 = smul.addr %s319, 4
        %s321 = smul.addr %s320, 8
        %s322 = scalar_lea.vmem %s0, %s321
        %p323 = pneg %p44
        %p324 = pneg %p41
        %p325 = pneg %p65
        %p326 = pneg %p62
        %p327 = pneg %p86
        %p328 = pneg %p83
        %p329 = pneg %p107
        %p330 = pneg %p104
        %p331 = pneg %p128
        %p332 = pneg %p125
        %p333 = pneg %p149
        %p334 = pneg %p146
        %p335 = pneg %p170
        %p336 = pneg %p167
        %p337 = pneg %p191
        %p338 = pneg %p188
        %p339 = pneg %p217
        %p340 = pneg %p214
        %s341 = sand.u32 %s204, 1
        %s342 = sand.u32 %s204, 1
        %s343 = smul.addr %s342, 104
        %s344 = scalar_lea.vmem [#allocation7], %s343
        %s345 = smul.u32 13, %s23
        %s346 = ssub.s32 25, %s345
        %p347 = scmp.lt.s32.totalorder %s346, 13
        %s348 = scalar_select %p347, %s346, 13
        %s349 = smul.u32 128, %s348
        %s350 = smul.u32 %s349, 4
        %p351 = scmp.lt.s32.totalorder %s345, 24
        %s352 = scalar_select %p351, %s345, 24
        %s353 = smul.addr %s352, 4
        %s354 = smul.addr %s353, 8
        %s355 = scalar_lea.vmem %s0, %s354
        %s356 = smul.u32 13, %s23
        %s357 = ssub.s32 25, %s356
        %p358 = scmp.lt.s32.totalorder %s357, 13
        %s359 = scalar_select %p358, %s357, 13
        %s360 = smul.u32 128, %s359
        %s361 = smul.u32 %s360, 4
        %s362 = smul.u32 13, %s23
        %s363 = ssub.s32 25, %s362
        %p364 = scmp.lt.s32.totalorder %s363, 13
        %s365 = scalar_select %p364, %s363, 13
        %s366 = smul.u32 128, %s365
        %v367 = vld [vmem:[%s355] sm:$0xff]
        %v368 = vld [vmem:[%s355 + $0x8] sm:$0xff]
        %v369 = vld [vmem:[%s355 + $0x10] sm:$0xff]
        %v370 = vld [vmem:[%s355 + $0x18] sm:$0xff]
        %v371 = vld [vmem:[%s355 + $0x20] sm:$0xff]
        %v372 = vld [vmem:[%s355 + $0x28] sm:$0xff]
        %v373 = vld [vmem:[%s355 + $0x30] sm:$0xff]
        %v374 = vld [vmem:[%s355 + $0x38] sm:$0xff]
        %v375 = vld [vmem:[%s355 + $0x40] sm:$0xff]
        %v376 = vld [vmem:[%s355 + $0x48] sm:$0xff]
        %v377 = vld [vmem:[%s355 + $0x50] sm:$0xff]
        %v378 = vld [vmem:[%s355 + $0x58] sm:$0xff]
        %v379 = vld [vmem:[%s355 + $0x60] sm:$0xff]
        %v380 = vld [vmem:[%s355 + $0x68] sm:$0xff]
        %v381 = vld [vmem:[%s355 + $0x70] sm:$0xff]
        %v382 = vld [vmem:[%s355 + $0x78] sm:$0xff]
        %v383 = vld [vmem:[%s355 + $0x80] sm:$0xff]
        %v384 = vld [vmem:[%s355 + $0x88] sm:$0xff]
        %v385 = vld [vmem:[%s355 + $0x90] sm:$0xff]
        %v386 = vld [vmem:[%s355 + $0x98] sm:$0xff]
        %v387 = vld [vmem:[%s355 + $0xa0] sm:$0xff]
        %v388 = vld [vmem:[%s355 + $0xa8] sm:$0xff]
        %v389 = vld [vmem:[%s355 + $0xb0] sm:$0xff]
        %v390 = vld [vmem:[%s355 + $0xb8] sm:$0xff]
        %v391 = vld [vmem:[%s355 + $0xc0] sm:$0xff]
        %v392 = vld [vmem:[%s355 + $0xc8] sm:$0xff]
        %v393 = vld [vmem:[%s355 + $0xd0] sm:$0xff]
        %v394 = vld [vmem:[%s355 + $0xd8] sm:$0xff]
        %v395 = vld [vmem:[%s355 + $0xe0] sm:$0xff]
        %v396 = vld [vmem:[%s355 + $0xe8] sm:$0xff]
        %v397 = vld [vmem:[%s355 + $0xf0] sm:$0xff]
        %v398 = vld [vmem:[%s355 + $0xf8] sm:$0xff]
        %v399 = vld [vmem:[%s355 + $0x100] sm:$0xff]
        %v400 = vld [vmem:[%s355 + $0x108] sm:$0xff]
        %v401 = vld [vmem:[%s355 + $0x110] sm:$0xff]
        %v402 = vld [vmem:[%s355 + $0x118] sm:$0xff]
        %v403 = vld [vmem:[%s355 + $0x120] sm:$0xff]
        %v404 = vld [vmem:[%s355 + $0x128] sm:$0xff]
        %v405 = vld [vmem:[%s355 + $0x130] sm:$0xff]
        %v406 = vld [vmem:[%s355 + $0x138] sm:$0xff]
        %v407 = vld [vmem:[%s355 + $0x140] sm:$0xff]
        %v408 = vld [vmem:[%s355 + $0x148] sm:$0xff]
        %v409 = vld [vmem:[%s355 + $0x150] sm:$0xff]
        %v410 = vld [vmem:[%s355 + $0x158] sm:$0xff]
        %v411 = vld [vmem:[%s355 + $0x160] sm:$0xff]
        %v412 = vld [vmem:[%s355 + $0x168] sm:$0xff]
        %v413 = vld [vmem:[%s355 + $0x170] sm:$0xff]
        %v414 = vld [vmem:[%s355 + $0x178] sm:$0xff]
        %v415 = vld [vmem:[%s355 + $0x180] sm:$0xff]
        %v416 = vld [vmem:[%s355 + $0x188] sm:$0xff]
        %v417 = vld [vmem:[%s355 + $0x190] sm:$0xff]
        %v418 = vld [vmem:[%s355 + $0x198] sm:$0xff]
        %v419 = vld [vmem:[#allocation3] sm:$0xff]
        %v420 = vld [vmem:[#allocation3 + $0x8] sm:$0xff]
        %v421 = vld [vmem:[#allocation3 + $0x10] sm:$0xff]
        %v422 = vld [vmem:[#allocation3 + $0x18] sm:$0xff]
        %v423 = vld [vmem:[#allocation3 + $0x20] sm:$0xff]
        %v424 = vld [vmem:[#allocation3 + $0x28] sm:$0xff]
        %v425 = vld [vmem:[#allocation3 + $0x30] sm:$0xff]
        %v426 = vld [vmem:[#allocation3 + $0x38] sm:$0xff]
        %v427 = vld [vmem:[#allocation3 + $0x40] sm:$0xff]
        %v428 = vld [vmem:[#allocation3 + $0x48] sm:$0xff]
        %v429 = vld [vmem:[#allocation3 + $0x50] sm:$0xff]
        %v430 = vld [vmem:[#allocation3 + $0x58] sm:$0xff]
        %v431 = vld [vmem:[#allocation3 + $0x60] sm:$0xff]
        %v432 = vld [vmem:[#allocation3 + $0x68] sm:$0xff]
        %v433 = vld [vmem:[#allocation3 + $0x70] sm:$0xff]
        %v434 = vld [vmem:[#allocation3 + $0x78] sm:$0xff]
        %v435 = vld [vmem:[#allocation3 + $0x80] sm:$0xff]
        %v436 = vld [vmem:[#allocation3 + $0x88] sm:$0xff]
        %v437 = vld [vmem:[#allocation3 + $0x90] sm:$0xff]
        %v438 = vld [vmem:[#allocation3 + $0x98] sm:$0xff]
        %v439 = vld [vmem:[#allocation3 + $0xa0] sm:$0xff]
        %v440 = vld [vmem:[#allocation3 + $0xa8] sm:$0xff]
        %v441 = vld [vmem:[#allocation3 + $0xb0] sm:$0xff]
        %v442 = vld [vmem:[#allocation3 + $0xb8] sm:$0xff]
        %v443 = vld [vmem:[#allocation3 + $0xc0] sm:$0xff]
        %v444 = vld [vmem:[#allocation3 + $0xc8] sm:$0xff]
        %v445 = vld [vmem:[#allocation3 + $0xd0] sm:$0xff]
        %v446 = vld [vmem:[#allocation3 + $0xd8] sm:$0xff]
        %v447 = vld [vmem:[#allocation3 + $0xe0] sm:$0xff]
        %v448 = vld [vmem:[#allocation3 + $0xe8] sm:$0xff]
        %v449 = vld [vmem:[#allocation3 + $0xf0] sm:$0xff]
        %v450 = vld [vmem:[#allocation3 + $0xf8] sm:$0xff]
        %v451 = vld [vmem:[#allocation3 + $0x100] sm:$0xff]
        %v452 = vld [vmem:[#allocation3 + $0x108] sm:$0xff]
        %v453 = vld [vmem:[#allocation3 + $0x110] sm:$0xff]
        %v454 = vld [vmem:[#allocation3 + $0x118] sm:$0xff]
        %v455 = vld [vmem:[#allocation3 + $0x120] sm:$0xff]
        %v456 = vld [vmem:[#allocation3 + $0x128] sm:$0xff]
        %v457 = vld [vmem:[#allocation3 + $0x130] sm:$0xff]
        %v458 = vld [vmem:[#allocation3 + $0x138] sm:$0xff]
        %v459 = vld [vmem:[#allocation3 + $0x140] sm:$0xff]
        %v460 = vld [vmem:[#allocation3 + $0x148] sm:$0xff]
        %v461 = vld [vmem:[#allocation3 + $0x150] sm:$0xff]
        %v462 = vld [vmem:[#allocation3 + $0x158] sm:$0xff]
        %v463 = vld [vmem:[#allocation3 + $0x160] sm:$0xff]
        %v464 = vld [vmem:[#allocation3 + $0x168] sm:$0xff]
        %v465 = vld [vmem:[#allocation3 + $0x170] sm:$0xff]
        %v466 = vld [vmem:[#allocation3 + $0x178] sm:$0xff]
        %v467 = vld [vmem:[#allocation3 + $0x180] sm:$0xff]
        %v468 = vld [vmem:[#allocation3 + $0x188] sm:$0xff]
        %v469 = vld [vmem:[#allocation3 + $0x190] sm:$0xff]
        %v470 = vld [vmem:[#allocation3 + $0x198] sm:$0xff]
        %v471 = vld [vmem:[#allocation3 + $0x1a0] sm:$0xff]
        %v472 = vld [vmem:[#allocation3 + $0x1a8] sm:$0xff]
        %v473 = vld [vmem:[#allocation3 + $0x1b0] sm:$0xff]
        %v474 = vld [vmem:[#allocation3 + $0x1b8] sm:$0xff]
        %v475 = vld [vmem:[#allocation3 + $0x1c0] sm:$0xff]
        %v476 = vld [vmem:[#allocation3 + $0x1c8] sm:$0xff]
        %v477 = vld [vmem:[#allocation3 + $0x1d0] sm:$0xff]
        %v478 = vld [vmem:[#allocation3 + $0x1d8] sm:$0xff]
        %v479 = vld [vmem:[#allocation3 + $0x1e0] sm:$0xff]
        %v480 = vld [vmem:[#allocation3 + $0x1e8] sm:$0xff]
        %v481 = vld [vmem:[#allocation3 + $0x1f0] sm:$0xff]
        %v482 = vld [vmem:[#allocation3 + $0x1f8] sm:$0xff]
        %v483 = vld [vmem:[#allocation3 + $0x200] sm:$0xff]
        %v484 = vld [vmem:[#allocation3 + $0x208] sm:$0xff]
        %v485 = vld [vmem:[#allocation3 + $0x210] sm:$0xff]
        %v486 = vld [vmem:[#allocation3 + $0x218] sm:$0xff]
        %v487 = vld [vmem:[#allocation3 + $0x220] sm:$0xff]
        %v488 = vld [vmem:[#allocation3 + $0x228] sm:$0xff]
        %v489 = vld [vmem:[#allocation3 + $0x230] sm:$0xff]
        %v490 = vld [vmem:[#allocation3 + $0x238] sm:$0xff]
        %v491 = vld [vmem:[#allocation3 + $0x240] sm:$0xff]
        %v492 = vld [vmem:[#allocation3 + $0x248] sm:$0xff]
        %v493 = vld [vmem:[#allocation3 + $0x250] sm:$0xff]
        %v494 = vld [vmem:[#allocation3 + $0x258] sm:$0xff]
        %v495 = vld [vmem:[#allocation3 + $0x260] sm:$0xff]
        %v496 = vld [vmem:[#allocation3 + $0x268] sm:$0xff]
        %v497 = vld [vmem:[#allocation3 + $0x270] sm:$0xff]
        %v498 = vld [vmem:[#allocation3 + $0x278] sm:$0xff]
        %v499 = vld [vmem:[#allocation3 + $0x280] sm:$0xff]
        %v500 = vld [vmem:[#allocation3 + $0x288] sm:$0xff]
        %v501 = vld [vmem:[#allocation3 + $0x290] sm:$0xff]
        %v502 = vld [vmem:[#allocation3 + $0x298] sm:$0xff]
        %v503 = vld [vmem:[#allocation3 + $0x2a0] sm:$0xff]
        %v504 = vld [vmem:[#allocation3 + $0x2a8] sm:$0xff]
        %v505 = vld [vmem:[#allocation3 + $0x2b0] sm:$0xff]
        %v506 = vld [vmem:[#allocation3 + $0x2b8] sm:$0xff]
        %v507 = vld [vmem:[#allocation3 + $0x2c0] sm:$0xff]
        %v508 = vld [vmem:[#allocation3 + $0x2c8] sm:$0xff]
        %v509 = vld [vmem:[#allocation3 + $0x2d0] sm:$0xff]
        %v510 = vld [vmem:[#allocation3 + $0x2d8] sm:$0xff]
        %v511 = vld [vmem:[#allocation3 + $0x2e0] sm:$0xff]
        %v512 = vld [vmem:[#allocation3 + $0x2e8] sm:$0xff]
        %v513 = vld [vmem:[#allocation3 + $0x2f0] sm:$0xff]
        %v514 = vld [vmem:[#allocation3 + $0x2f8] sm:$0xff]
        %v515 = vld [vmem:[#allocation3 + $0x300] sm:$0xff]
        %v516 = vld [vmem:[#allocation3 + $0x308] sm:$0xff]
        %v517 = vld [vmem:[#allocation3 + $0x310] sm:$0xff]
        %v518 = vld [vmem:[#allocation3 + $0x318] sm:$0xff]
        %v519 = vld [vmem:[#allocation3 + $0x320] sm:$0xff]
        %v520 = vld [vmem:[#allocation3 + $0x328] sm:$0xff]
        %v521 = vld [vmem:[#allocation3 + $0x330] sm:$0xff]
        %v522 = vld [vmem:[#allocation3 + $0x338] sm:$0xff]
        %v523 = vld [vmem:[#allocation3 + $0x340] sm:$0xff]
        %v524 = vld [vmem:[#allocation3 + $0x348] sm:$0xff]
        %v525 = vld [vmem:[#allocation3 + $0x350] sm:$0xff]
        %v526 = vld [vmem:[#allocation3 + $0x358] sm:$0xff]
        %v527 = vld [vmem:[#allocation3 + $0x360] sm:$0xff]
        %v528 = vld [vmem:[#allocation3 + $0x368] sm:$0xff]
        %v529 = vld [vmem:[#allocation3 + $0x370] sm:$0xff]
        %v530 = vld [vmem:[#allocation3 + $0x378] sm:$0xff]
        %v531 = vld [vmem:[#allocation3 + $0x380] sm:$0xff]
        %v532 = vld [vmem:[#allocation3 + $0x388] sm:$0xff]
        %v533 = vld [vmem:[#allocation3 + $0x390] sm:$0xff]
        %v534 = vld [vmem:[#allocation3 + $0x398] sm:$0xff]
        %v535 = vld [vmem:[#allocation3 + $0x3a0] sm:$0xff]
        %v536 = vld [vmem:[#allocation3 + $0x3a8] sm:$0xff]
        %v537 = vld [vmem:[#allocation3 + $0x3b0] sm:$0xff]
        %v538 = vld [vmem:[#allocation3 + $0x3b8] sm:$0xff]
        %v539 = vld [vmem:[#allocation3 + $0x3c0] sm:$0xff]
        %v540 = vld [vmem:[#allocation3 + $0x3c8] sm:$0xff]
        %v541 = vld [vmem:[#allocation3 + $0x3d0] sm:$0xff]
        %v542 = vld [vmem:[#allocation3 + $0x3d8] sm:$0xff]
        %v543 = vld [vmem:[#allocation3 + $0x3e0] sm:$0xff]
        %v544 = vld [vmem:[#allocation3 + $0x3e8] sm:$0xff]
        %v545 = vld [vmem:[#allocation3 + $0x3f0] sm:$0xff]
        %v546 = vld [vmem:[#allocation3 + $0x3f8] sm:$0xff]
        %v547 = vld [vmem:[%s2] sm:$0x3]
        %v549 = vlaneseq
        %v550 = vshrl.u32 %v549, 7
        %v551 = vsub.s32 0, %v550
        %v552 = vrot.slane %v547, %v551
        %v553 = vlaneseq
        %v554 = vshrl.u32 %v553, 7
        %v555 = vsub.s32 1, %v554
        %v556 = vrot.slane %v547, %v555
        %559 = vmatprep.subr.mxu0 %v420
        %560 = vmatpush1.msra.mxu0 %v419
        %561 = vmatprep.subr.mxu0 %v422
        %562 = vmatpush1.msra.mxu0 %v421
        %563 = vmatprep.subr.mxu0 %v424
        %564 = vmatpush1.msra.mxu0 %v423
        %565 = vmatprep.subr.mxu0 %v426
        %566 = vmatpush1.msra.mxu0 %v425
        %567 = vmatprep.subr.mxu0 %v428
        %568 = vmatpush1.msra.mxu0 %v427
        %569 = vmatprep.subr.mxu0 %v430
        %570 = vmatpush1.msra.mxu0 %v429
        %571 = vmatprep.subr.mxu0 %v432
        %572 = vmatpush1.msra.mxu0 %v431
        %573 = vmatprep.subr.mxu0 %v434
        %574 = vmatpush1.msra.mxu0 %v433
        %575 = vmatprep.subr.mxu0 %v436
        %576 = vmatpush1.msra.mxu0 %v435
        %577 = vmatprep.subr.mxu0 %v438
        %578 = vmatpush1.msra.mxu0 %v437
        %579 = vmatprep.subr.mxu0 %v440
        %580 = vmatpush1.msra.mxu0 %v439
        %581 = vmatprep.subr.mxu0 %v442
        %582 = vmatpush1.msra.mxu0 %v441
        %583 = vmatprep.subr.mxu0 %v444
        %584 = vmatpush1.msra.mxu0 %v443
        %585 = vmatprep.subr.mxu0 %v446
        %586 = vmatpush1.msra.mxu0 %v445
        %587 = vmatprep.subr.mxu0 %v448
        %588 = vmatpush1.msra.mxu0 %v447
        %589 = vmatprep.subr.mxu0 %v450
        %590 = vmatpush1.msra.mxu0 %v449
        %591 = vmatprep.subr.mxu0 %v452
        %592 = vmatpush1.msra.mxu0 %v451
        %593 = vmatprep.subr.mxu0 %v454
        %594 = vmatpush1.msra.mxu0 %v453
        %595 = vmatprep.subr.mxu0 %v456
        %596 = vmatpush1.msra.mxu0 %v455
        %597 = vmatprep.subr.mxu0 %v458
        %598 = vmatpush1.msra.mxu0 %v457
        %599 = vmatprep.subr.mxu0 %v460
        %600 = vmatpush1.msra.mxu0 %v459
        %601 = vmatprep.subr.mxu0 %v462
        %602 = vmatpush1.msra.mxu0 %v461
        %603 = vmatprep.subr.mxu0 %v464
        %604 = vmatpush1.msra.mxu0 %v463
        %605 = vmatprep.subr.mxu0 %v466
        %606 = vmatpush1.msra.mxu0 %v465
        %607 = vmatprep.subr.mxu0 %v468
        %608 = vmatpush1.msra.mxu0 %v467
        %609 = vmatprep.subr.mxu0 %v470
        %610 = vmatpush1.msra.mxu0 %v469
        %611 = vmatprep.subr.mxu0 %v472
        %612 = vmatpush1.msra.mxu0 %v471
        %613 = vmatprep.subr.mxu0 %v474
        %614 = vmatpush1.msra.mxu0 %v473
        %615 = vmatprep.subr.mxu0 %v476
        %616 = vmatpush1.msra.mxu0 %v475
        %617 = vmatprep.subr.mxu0 %v478
        %618 = vmatpush1.msra.mxu0 %v477
        %619 = vmatprep.subr.mxu0 %v480
        %620 = vmatpush1.msra.mxu0 %v479
        %621 = vmatprep.subr.mxu0 %v482
        %622 = vmatpush1.msra.mxu0 %v481
        %623 = vmatprep.mubr.f32.mxu0 %v368
        %624 = vmatmul.mubr.f32.gmra.mrb[0].mxu0 %v367
        %v625 = vpop.f32.mrb[0].mxu0
        %v626 = vadd.f32 %v552, %v625
        %v627 = vpop.f32.mrb[0].mxu0
        %v628 = vadd.f32 %v556, %v627
        %629 = vmatprep.mubr.f32.mxu0 %v372
        %630 = vmatmul.mubr.f32.gmra.mrb[0].mxu0 %v371
        %v631 = vpop.f32.mrb[0].mxu0
        %v632 = vadd.f32 %v552, %v631
        %v633 = vpop.f32.mrb[0].mxu0
        %v634 = vadd.f32 %v556, %v633
        %635 = vmatprep.mubr.f32.mxu0 %v376
        %636 = vmatmul.mubr.f32.gmra.mrb[0].mxu0 %v375
        %v637 = vpop.f32.mrb[0].mxu0
        %v638 = vadd.f32 %v552, %v637
        %v639 = vpop.f32.mrb[0].mxu0
        %v640 = vadd.f32 %v556, %v639
        %641 = vmatprep.mubr.f32.mxu0 %v380
        %642 = vmatmul.mubr.f32.gmra.mrb[0].mxu0 %v379
        %v643 = vpop.f32.mrb[0].mxu0
        %v644 = vadd.f32 %v552, %v643
        %v645 = vpop.f32.mrb[0].mxu0
        %v646 = vadd.f32 %v556, %v645
        %647 = vmatprep.mubr.f32.mxu0 %v384
        %648 = vmatmul.mubr.f32.gmra.mrb[0].mxu0 %v383
        %v649 = vpop.f32.mrb[0].mxu0
        %v650 = vadd.f32 %v552, %v649
        %v651 = vpop.f32.mrb[0].mxu0
        %v652 = vadd.f32 %v556, %v651
        %653 = vmatprep.mubr.f32.mxu0 %v388
        %654 = vmatmul.mubr.f32.gmra.mrb[0].mxu0 %v387
        %v655 = vpop.f32.mrb[0].mxu0
        %v656 = vadd.f32 %v552, %v655
        %v657 = vpop.f32.mrb[0].mxu0
        %v658 = vadd.f32 %v556, %v657
        %659 = vmatprep.mubr.f32.mxu0 %v392
        %660 = vmatmul.mubr.f32.gmra.mrb[0].mxu0 %v391
        %v661 = vpop.f32.mrb[0].mxu0
        %v662 = vadd.f32 %v552, %v661
        %v663 = vpop.f32.mrb[0].mxu0
        %v664 = vadd.f32 %v556, %v663
        %665 = vmatprep.mubr.f32.mxu0 %v396
        %666 = vmatmul.mubr.f32.gmra.mrb[0].mxu0 %v395
        %v667 = vpop.f32.mrb[0].mxu0
        %v668 = vadd.f32 %v552, %v667
        %v669 = vpop.f32.mrb[0].mxu0
        %v670 = vadd.f32 %v556, %v669
        %671 = vmatprep.mubr.f32.mxu0 %v400
        %672 = vmatmul.mubr.f32.gmra.mrb[0].mxu0 %v399
        %v673 = vpop.f32.mrb[0].mxu0
        %v674 = vadd.f32 %v552, %v673
        %v675 = vpop.f32.mrb[0].mxu0
        %v676 = vadd.f32 %v556, %v675
        %677 = vmatprep.mubr.f32.mxu0 %v404
        %678 = vmatmul.mubr.f32.gmra.mrb[0].mxu0 %v403
        %v679 = vpop.f32.mrb[0].mxu0
        %v680 = vadd.f32 %v552, %v679
        %v681 = vpop.f32.mrb[0].mxu0
        %v682 = vadd.f32 %v556, %v681
        %683 = vmatprep.mubr.f32.mxu0 %v408
        %684 = vmatmul.mubr.f32.gmra.mrb[0].mxu0 %v407
        %v685 = vpop.f32.mrb[0].mxu0
        %v686 = vadd.f32 %v552, %v685
        %v687 = vpop.f32.mrb[0].mxu0
        %v688 = vadd.f32 %v556, %v687
        %689 = vmatprep.mubr.f32.mxu0 %v412
        %690 = vmatmul.mubr.f32.gmra.mrb[0].mxu0 %v411
        %v691 = vpop.f32.mrb[0].mxu0
        %v692 = vadd.f32 %v552, %v691
        %v693 = vpop.f32.mrb[0].mxu0
        %v694 = vadd.f32 %v556, %v693
        %695 = vmatprep.mubr.f32.mxu0 %v416
        %696 = vmatmul.mubr.f32.gmra.mrb[0].mxu0 %v415
        %v697 = vpop.f32.mrb[0].mxu0
        %v698 = vadd.f32 %v552, %v697
        %v699 = vpop.f32.mrb[0].mxu0
        %v700 = vadd.f32 %v556, %v699
        %701 = vdwg.mxu0
        %702 = vmatprep.subr.mxu0 %v484
        %703 = vmatpush1.msra.mxu0 %v483
        %704 = vmatprep.subr.mxu0 %v486
        %705 = vmatpush1.msra.mxu0 %v485
        %706 = vmatprep.subr.mxu0 %v488
        %707 = vmatpush1.msra.mxu0 %v487
        %708 = vmatprep.subr.mxu0 %v490
        %709 = vmatpush1.msra.mxu0 %v489
        %710 = vmatprep.subr.mxu0 %v492
        %711 = vmatpush1.msra.mxu0 %v491
        %712 = vmatprep.subr.mxu0 %v494
        %713 = vmatpush1.msra.mxu0 %v493
        %714 = vmatprep.subr.mxu0 %v496
        %715 = vmatpush1.msra.mxu0 %v495
        %716 = vmatprep.subr.mxu0 %v498
        %717 = vmatpush1.msra.mxu0 %v497
        %718 = vmatprep.subr.mxu0 %v500
        %719 = vmatpush1.msra.mxu0 %v499
        %720 = vmatprep.subr.mxu0 %v502
        %721 = vmatpush1.msra.mxu0 %v501
        %722 = vmatprep.subr.mxu0 %v504
        %723 = vmatpush1.msra.mxu0 %v503
        %724 = vmatprep.subr.mxu0 %v506
        %725 = vmatpush1.msra.mxu0 %v505
        %726 = vmatprep.subr.mxu0 %v508
        %727 = vmatpush1.msra.mxu0 %v507
        %728 = vmatprep.subr.mxu0 %v510
        %729 = vmatpush1.msra.mxu0 %v509
        %730 = vmatprep.subr.mxu0 %v512
        %731 = vmatpush1.msra.mxu0 %v511
        %732 = vmatprep.subr.mxu0 %v514
        %733 = vmatpush1.msra.mxu0 %v513
        %734 = vmatprep.subr.mxu0 %v516
        %735 = vmatpush1.msra.mxu0 %v515
        %736 = vmatprep.subr.mxu0 %v518
        %737 = vmatpush1.msra.mxu0 %v517
        %738 = vmatprep.subr.mxu0 %v520
        %739 = vmatpush1.msra.mxu0 %v519
        %740 = vmatprep.subr.mxu0 %v522
        %741 = vmatpush1.msra.mxu0 %v521
        %742 = vmatprep.subr.mxu0 %v524
        %743 = vmatpush1.msra.mxu0 %v523
        %744 = vmatprep.subr.mxu0 %v526
        %745 = vmatpush1.msra.mxu0 %v525
        %746 = vmatprep.subr.mxu0 %v528
        %747 = vmatpush1.msra.mxu0 %v527
        %748 = vmatprep.subr.mxu0 %v530
        %749 = vmatpush1.msra.mxu0 %v529
        %750 = vmatprep.subr.mxu0 %v532
        %751 = vmatpush1.msra.mxu0 %v531
        %752 = vmatprep.subr.mxu0 %v534
        %753 = vmatpush1.msra.mxu0 %v533
        %754 = vmatprep.subr.mxu0 %v536
        %755 = vmatpush1.msra.mxu0 %v535
        %756 = vmatprep.subr.mxu0 %v538
        %757 = vmatpush1.msra.mxu0 %v537
        %758 = vmatprep.subr.mxu0 %v540
        %759 = vmatpush1.msra.mxu0 %v539
        %760 = vmatprep.subr.mxu0 %v542
        %761 = vmatpush1.msra.mxu0 %v541
        %762 = vmatprep.subr.mxu0 %v544
        %763 = vmatpush1.msra.mxu0 %v543
        %764 = vmatprep.subr.mxu0 %v546
        %765 = vmatpush1.msra.mxu0 %v545
        %766 = vmatprep.mubr.f32.mxu0 %v370
        %767 = vmatmul.mubr.f32.gmra.mrb[0].mxu0 %v369
        %v768 = vpop.f32.mrb[0].mxu0
        %v769 = vadd.f32 %v626, %v768
        %v770 = vpop.f32.mrb[0].mxu0
        %v771 = vadd.f32 %v628, %v770
        %772 = vmatprep.mubr.f32.mxu0 %v374
        %773 = vmatmul.mubr.f32.gmra.mrb[0].mxu0 %v373
        %v774 = vpop.f32.mrb[0].mxu0
        %v775 = vadd.f32 %v632, %v774
        %v776 = vpop.f32.mrb[0].mxu0
        %v777 = vadd.f32 %v634, %v776
        %778 = vmatprep.mubr.f32.mxu0 %v378
        %779 = vmatmul.mubr.f32.gmra.mrb[0].mxu0 %v377
        %v780 = vpop.f32.mrb[0].mxu0
        %v781 = vadd.f32 %v638, %v780
        %v782 = vpop.f32.mrb[0].mxu0
        %v783 = vadd.f32 %v640, %v782
        %784 = vmatprep.mubr.f32.mxu0 %v382
        %785 = vmatmul.mubr.f32.gmra.mrb[0].mxu0 %v381
        %v786 = vpop.f32.mrb[0].mxu0
        %v787 = vadd.f32 %v644, %v786
        %v788 = vpop.f32.mrb[0].mxu0
        %v789 = vadd.f32 %v646, %v788
        %790 = vmatprep.mubr.f32.mxu0 %v386
        %791 = vmatmul.mubr.f32.gmra.mrb[0].mxu0 %v385
        %v792 = vpop.f32.mrb[0].mxu0
        %v793 = vadd.f32 %v650, %v792
        %v794 = vpop.f32.mrb[0].mxu0
        %v795 = vadd.f32 %v652, %v794
        %796 = vmatprep.mubr.f32.mxu0 %v390
        %797 = vmatmul.mubr.f32.gmra.mrb[0].mxu0 %v389
        %v798 = vpop.f32.mrb[0].mxu0
        %v799 = vadd.f32 %v656, %v798
        %v800 = vpop.f32.mrb[0].mxu0
        %v801 = vadd.f32 %v658, %v800
        %802 = vmatprep.mubr.f32.mxu0 %v394
        %803 = vmatmul.mubr.f32.gmra.mrb[0].mxu0 %v393
        %v804 = vpop.f32.mrb[0].mxu0
        %v805 = vadd.f32 %v662, %v804
        %v806 = vpop.f32.mrb[0].mxu0
        %v807 = vadd.f32 %v664, %v806
        %808 = vmatprep.mubr.f32.mxu0 %v398
        %809 = vmatmul.mubr.f32.gmra.mrb[0].mxu0 %v397
        %v810 = vpop.f32.mrb[0].mxu0
        %v811 = vadd.f32 %v668, %v810
        %v812 = vpop.f32.mrb[0].mxu0
        %v813 = vadd.f32 %v670, %v812
        %814 = vmatprep.mubr.f32.mxu0 %v402
        %815 = vmatmul.mubr.f32.gmra.mrb[0].mxu0 %v401
        %v816 = vpop.f32.mrb[0].mxu0
        %v817 = vadd.f32 %v674, %v816
        %v818 = vpop.f32.mrb[0].mxu0
        %v819 = vadd.f32 %v676, %v818
        %820 = vmatprep.mubr.f32.mxu0 %v406
        %821 = vmatmul.mubr.f32.gmra.mrb[0].mxu0 %v405
        %v822 = vpop.f32.mrb[0].mxu0
        %v823 = vadd.f32 %v680, %v822
        %v824 = vpop.f32.mrb[0].mxu0
        %v825 = vadd.f32 %v682, %v824
        %826 = vmatprep.mubr.f32.mxu0 %v410
        %827 = vmatmul.mubr.f32.gmra.mrb[0].mxu0 %v409
        %v828 = vpop.f32.mrb[0].mxu0
        %v829 = vadd.f32 %v686, %v828
        %v830 = vpop.f32.mrb[0].mxu0
        %v831 = vadd.f32 %v688, %v830
        %832 = vmatprep.mubr.f32.mxu0 %v414
        %833 = vmatmul.mubr.f32.gmra.mrb[0].mxu0 %v413
        %v834 = vpop.f32.mrb[0].mxu0
        %v835 = vadd.f32 %v692, %v834
        %v836 = vpop.f32.mrb[0].mxu0
        %v837 = vadd.f32 %v694, %v836
        %838 = vmatprep.mubr.f32.mxu0 %v418
        %839 = vmatmul.mubr.f32.gmra.mrb[0].mxu0 %v417
        %v840 = vpop.f32.mrb[0].mxu0
        %v841 = vadd.f32 %v698, %v840
        %v842 = vpop.f32.mrb[0].mxu0
        %v843 = vadd.f32 %v700, %v842
        %844 = vdwg.mxu0
        %v845 = vmax.f32 %v769, 0.0
        %v846 = vmax.f32 %v771, 0.0
        %v847 = vmax.f32 %v775, 0.0
        %v848 = vmax.f32 %v777, 0.0
        %v849 = vmax.f32 %v781, 0.0
        %v850 = vmax.f32 %v783, 0.0
        %v851 = vmax.f32 %v787, 0.0
        %v852 = vmax.f32 %v789, 0.0
        %v853 = vmax.f32 %v793, 0.0
        %v854 = vmax.f32 %v795, 0.0
        %v855 = vmax.f32 %v799, 0.0
        %v856 = vmax.f32 %v801, 0.0
        %v857 = vmax.f32 %v805, 0.0
        %v858 = vmax.f32 %v807, 0.0
        %v859 = vmax.f32 %v811, 0.0
        %v860 = vmax.f32 %v813, 0.0
        %v861 = vmax.f32 %v817, 0.0
        %v862 = vmax.f32 %v819, 0.0
        %v863 = vmax.f32 %v823, 0.0
        %v864 = vmax.f32 %v825, 0.0
        %v865 = vmax.f32 %v829, 0.0
        %v866 = vmax.f32 %v831, 0.0
        %v867 = vmax.f32 %v835, 0.0
        %v868 = vmax.f32 %v837, 0.0
        %v869 = vmax.f32 %v841, 0.0
        %v870 = vmax.f32 %v843, 0.0
        %v871 = vld [vmem:[%s3] sm:$0xff]
        %v872 = vld [vmem:[%s3 + $0x8] sm:$0xff]
        %v873 = vld [vmem:[%s3 + $0x10] sm:$0xff]
        %v874 = vld [vmem:[%s3 + $0x18] sm:$0xff]
        %v875 = vld [vmem:[%s3 + $0x20] sm:$0xff]
        %v876 = vld [vmem:[%s3 + $0x28] sm:$0xff]
        %v877 = vld [vmem:[%s3 + $0x30] sm:$0xff]
        %v878 = vld [vmem:[%s3 + $0x38] sm:$0xff]
        %v879 = vld [vmem:[%s3 + $0x40] sm:$0xff]
        %v880 = vld [vmem:[%s3 + $0x48] sm:$0xff]
        %v881 = vld [vmem:[%s3 + $0x50] sm:$0xff]
        %v882 = vld [vmem:[%s3 + $0x58] sm:$0xff]
        %v883 = vld [vmem:[%s3 + $0x60] sm:$0xff]
        %v884 = vld [vmem:[%s3 + $0x68] sm:$0xff]
        %v885 = vld [vmem:[%s3 + $0x70] sm:$0xff]
        %v886 = vld [vmem:[%s3 + $0x78] sm:$0xff]
        %v887 = vld [vmem:[%s3 + $0x80] sm:$0xff]
        %v888 = vld [vmem:[%s3 + $0x88] sm:$0xff]
        %v889 = vld [vmem:[%s3 + $0x90] sm:$0xff]
        %v890 = vld [vmem:[%s3 + $0x98] sm:$0xff]
        %v891 = vld [vmem:[%s3 + $0xa0] sm:$0xff]
        %v892 = vld [vmem:[%s3 + $0xa8] sm:$0xff]
        %v893 = vld [vmem:[%s3 + $0xb0] sm:$0xff]
        %v894 = vld [vmem:[%s3 + $0xb8] sm:$0xff]
        %v895 = vld [vmem:[%s3 + $0xc0] sm:$0xff]
        %v896 = vld [vmem:[%s3 + $0xc8] sm:$0xff]
        %v897 = vld [vmem:[%s3 + $0xd0] sm:$0xff]
        %v898 = vld [vmem:[%s3 + $0xd8] sm:$0xff]
        %v899 = vld [vmem:[%s3 + $0xe0] sm:$0xff]
        %v900 = vld [vmem:[%s3 + $0xe8] sm:$0xff]
        %v901 = vld [vmem:[%s3 + $0xf0] sm:$0xff]
        %v902 = vld [vmem:[%s3 + $0xf8] sm:$0xff]
        %v903 = vld [vmem:[#allocation2] sm:$0x1]
        %v905 = vlaneseq
        %v906 = vshrl.u32 %v905, 7
        %v907 = vsub.s32 0, %v906
        %v908 = vrot.slane %v903, %v907
        %909 = vset.pattern.permute.xlu0 0
        %910 = vperm.xlu0 %909, %v908
        %v911 = vpop.permute.xlu0 %910
        %913 = vmatprep.subr.mxu0 0.0
        %914 = vmatpush1.msra.mxu0 %v871
        %915 = vmatprep.subr.mxu0 0.0
        %916 = vmatpush1.msra.mxu0 %v872
        %917 = vmatprep.subr.mxu0 0.0
        %918 = vmatpush1.msra.mxu0 %v873
        %919 = vmatprep.subr.mxu0 0.0
        %920 = vmatpush1.msra.mxu0 %v874
        %921 = vmatprep.subr.mxu0 0.0
        %922 = vmatpush1.msra.mxu0 %v875
        %923 = vmatprep.subr.mxu0 0.0
        %924 = vmatpush1.msra.mxu0 %v876
        %925 = vmatprep.subr.mxu0 0.0
        %926 = vmatpush1.msra.mxu0 %v877
        %927 = vmatprep.subr.mxu0 0.0
        %928 = vmatpush1.msra.mxu0 %v878
        %929 = vmatprep.subr.mxu0 0.0
        %930 = vmatpush1.msra.mxu0 %v879
        %931 = vmatprep.subr.mxu0 0.0
        %932 = vmatpush1.msra.mxu0 %v880
        %933 = vmatprep.subr.mxu0 0.0
        %934 = vmatpush1.msra.mxu0 %v881
        %935 = vmatprep.subr.mxu0 0.0
        %936 = vmatpush1.msra.mxu0 %v882
        %937 = vmatprep.subr.mxu0 0.0
        %938 = vmatpush1.msra.mxu0 %v883
        %939 = vmatprep.subr.mxu0 0.0
        %940 = vmatpush1.msra.mxu0 %v884
        %941 = vmatprep.subr.mxu0 0.0
        %942 = vmatpush1.msra.mxu0 %v885
        %943 = vmatprep.subr.mxu0 0.0
        %944 = vmatpush1.msra.mxu0 %v886
        %945 = vmatprep.subr.mxu0 0.0
        %946 = vmatpush1.msra.mxu0 %v887
        %947 = vmatprep.subr.mxu0 0.0
        %948 = vmatpush1.msra.mxu0 %v888
        %949 = vmatprep.subr.mxu0 0.0
        %950 = vmatpush1.msra.mxu0 %v889
        %951 = vmatprep.subr.mxu0 0.0
        %952 = vmatpush1.msra.mxu0 %v890
        %953 = vmatprep.subr.mxu0 0.0
        %954 = vmatpush1.msra.mxu0 %v891
        %955 = vmatprep.subr.mxu0 0.0
        %956 = vmatpush1.msra.mxu0 %v892
        %957 = vmatprep.subr.mxu0 0.0
        %958 = vmatpush1.msra.mxu0 %v893
        %959 = vmatprep.subr.mxu0 0.0
        %960 = vmatpush1.msra.mxu0 %v894
        %961 = vmatprep.subr.mxu0 0.0
        %962 = vmatpush1.msra.mxu0 %v895
        %963 = vmatprep.subr.mxu0 0.0
        %964 = vmatpush1.msra.mxu0 %v896
        %965 = vmatprep.subr.mxu0 0.0
        %966 = vmatpush1.msra.mxu0 %v897
        %967 = vmatprep.subr.mxu0 0.0
        %968 = vmatpush1.msra.mxu0 %v898
        %969 = vmatprep.subr.mxu0 0.0
        %970 = vmatpush1.msra.mxu0 %v899
        %971 = vmatprep.subr.mxu0 0.0
        %972 = vmatpush1.msra.mxu0 %v900
        %973 = vmatprep.subr.mxu0 0.0
        %974 = vmatpush1.msra.mxu0 %v901
        %975 = vmatprep.subr.mxu0 0.0
        %976 = vmatpush1.msra.mxu0 %v902
        %977 = vmatprep.mubr.f32.mxu0 %v846
        %978 = vmatmul.mubr.f32.gmra.mrb[0].mxu0 %v845
        %v979 = vpop.f32.mrb[0].mxu0
        %v980 = vadd.f32 %v911, %v979
        %v981 = vpop.f32.mrb[0].mxu0
        %982 = vmatprep.mubr.f32.mxu0 %v848
        %983 = vmatmul.mubr.f32.gmra.mrb[0].mxu0 %v847
        %v984 = vpop.f32.mrb[0].mxu0
        %v985 = vadd.f32 %v911, %v984
        %v986 = vpop.f32.mrb[0].mxu0
        %987 = vmatprep.mubr.f32.mxu0 %v850
        %988 = vmatmul.mubr.f32.gmra.mrb[0].mxu0 %v849
        %v989 = vpop.f32.mrb[0].mxu0
        %v990 = vadd.f32 %v911, %v989
        %v991 = vpop.f32.mrb[0].mxu0
        %992 = vmatprep.mubr.f32.mxu0 %v852
        %993 = vmatmul.mubr.f32.gmra.mrb[0].mxu0 %v851
        %v994 = vpop.f32.mrb[0].mxu0
        %v995 = vadd.f32 %v911, %v994
        %v996 = vpop.f32.mrb[0].mxu0
        %997 = vmatprep.mubr.f32.mxu0 %v854
        %998 = vmatmul.mubr.f32.gmra.mrb[0].mxu0 %v853
        %v999 = vpop.f32.mrb[0].mxu0
        %v1000 = vadd.f32 %v911, %v999
        %v1001 = vpop.f32.mrb[0].mxu0
        %1002 = vmatprep.mubr.f32.mxu0 %v856
        %1003 = vmatmul.mubr.f32.gmra.mrb[0].mxu0 %v855
        %v1004 = vpop.f32.mrb[0].mxu0
        %v1005 = vadd.f32 %v911, %v1004
        %v1006 = vpop.f32.mrb[0].mxu0
        %1007 = vmatprep.mubr.f32.mxu0 %v858
        %1008 = vmatmul.mubr.f32.gmra.mrb[0].mxu0 %v857
        %v1009 = vpop.f32.mrb[0].mxu0
        %v1010 = vadd.f32 %v911, %v1009
        %v1011 = vpop.f32.mrb[0].mxu0
        %1012 = vmatprep.mubr.f32.mxu0 %v860
        %1013 = vmatmul.mubr.f32.gmra.mrb[0].mxu0 %v859
        %v1014 = vpop.f32.mrb[0].mxu0
        %v1015 = vadd.f32 %v911, %v1014
        %v1016 = vpop.f32.mrb[0].mxu0
        %1017 = vmatprep.mubr.f32.mxu0 %v862
        %1018 = vmatmul.mubr.f32.gmra.mrb[0].mxu0 %v861
        %v1019 = vpop.f32.mrb[0].mxu0
        %v1020 = vadd.f32 %v911, %v1019
        %v1021 = vpop.f32.mrb[0].mxu0
        %1022 = vmatprep.mubr.f32.mxu0 %v864
        %1023 = vmatmul.mubr.f32.gmra.mrb[0].mxu0 %v863
        %v1024 = vpop.f32.mrb[0].mxu0
        %v1025 = vadd.f32 %v911, %v1024
        %v1026 = vpop.f32.mrb[0].mxu0
        %1027 = vmatprep.mubr.f32.mxu0 %v866
        %1028 = vmatmul.mubr.f32.gmra.mrb[0].mxu0 %v865
        %v1029 = vpop.f32.mrb[0].mxu0
        %v1030 = vadd.f32 %v911, %v1029
        %v1031 = vpop.f32.mrb[0].mxu0
        %1032 = vmatprep.mubr.f32.mxu0 %v868
        %1033 = vmatmul.mubr.f32.gmra.mrb[0].mxu0 %v867
        %v1034 = vpop.f32.mrb[0].mxu0
        %v1035 = vadd.f32 %v911, %v1034
        %v1036 = vpop.f32.mrb[0].mxu0
        %1037 = vmatprep.mubr.f32.mxu0 %v870
        %1038 = vmatmul.mubr.f32.gmra.mrb[0].mxu0 %v869
        %v1039 = vpop.f32.mrb[0].mxu0
        %v1040 = vadd.f32 %v911, %v1039
        %v1041 = vpop.f32.mrb[0].mxu0
        %1042 = vdwg.mxu0
        %vm1043 = vcmask 130048
        %v1044 = vsel %vm1043, %v980, -inf
        %1045 = vmax.xlane.f32.xlu0 %v1044
        %v1046 = vpop.xlane.xlu0 %1045
        %v1047 = vsel %vm1043, %v985, -inf
        %1048 = vmax.xlane.f32.xlu0 %v1047
        %v1049 = vpop.xlane.xlu0 %1048
        %v1050 = vsel %vm1043, %v990, -inf
        %1051 = vmax.xlane.f32.xlu0 %v1050
        %v1052 = vpop.xlane.xlu0 %1051
        %v1053 = vsel %vm1043, %v995, -inf
        %1054 = vmax.xlane.f32.xlu0 %v1053
        %v1055 = vpop.xlane.xlu0 %1054
        %v1056 = vsel %vm1043, %v1000, -inf
        %1057 = vmax.xlane.f32.xlu0 %v1056
        %v1058 = vpop.xlane.xlu0 %1057
        %v1059 = vsel %vm1043, %v1005, -inf
        %1060 = vmax.xlane.f32.xlu0 %v1059
        %v1061 = vpop.xlane.xlu0 %1060
        %v1062 = vsel %vm1043, %v1010, -inf
        %1063 = vmax.xlane.f32.xlu0 %v1062
        %v1064 = vpop.xlane.xlu0 %1063
        %v1065 = vsel %vm1043, %v1015, -inf
        %1066 = vmax.xlane.f32.xlu0 %v1065
        %v1067 = vpop.xlane.xlu0 %1066
        %v1068 = vsel %vm1043, %v1020, -inf
        %1069 = vmax.xlane.f32.xlu0 %v1068
        %v1070 = vpop.xlane.xlu0 %1069
        %v1071 = vsel %vm1043, %v1025, -inf
        %1072 = vmax.xlane.f32.xlu0 %v1071
        %v1073 = vpop.xlane.xlu0 %1072
        %v1074 = vsel %vm1043, %v1030, -inf
        %1075 = vmax.xlane.f32.xlu0 %v1074
        %v1076 = vpop.xlane.xlu0 %1075
        %v1077 = vsel %vm1043, %v1035, -inf
        %1078 = vmax.xlane.f32.xlu0 %v1077
        %v1079 = vpop.xlane.xlu0 %1078
        %v1080 = vsel %vm1043, %v1040, -inf
        %1081 = vmax.xlane.f32.xlu0 %v1080
        %v1082 = vpop.xlane.xlu0 %1081
        %v1083 = vsub.f32 %v980, %v1046
        %v1084 = vsub.f32 %v985, %v1049
        %v1085 = vsub.f32 %v990, %v1052
        %v1086 = vsub.f32 %v995, %v1055
        %v1087 = vsub.f32 %v1000, %v1058
        %v1088 = vsub.f32 %v1005, %v1061
        %v1089 = vsub.f32 %v1010, %v1064
        %v1090 = vsub.f32 %v1015, %v1067
        %v1091 = vsub.f32 %v1020, %v1070
        %v1092 = vsub.f32 %v1025, %v1073
        %v1093 = vsub.f32 %v1030, %v1076
        %v1094 = vsub.f32 %v1035, %v1079
        %v1095 = vsub.f32 %v1040, %v1082
        %v1096 = vmul.f32 %v1083, 1.442695
        %v1097 = vpow.pop %v1096
        %v1098 = vmul.f32 %v1084, 1.442695
        %v1099 = vpow.pop %v1098
        %v1100 = vmul.f32 %v1085, 1.442695
        %v1101 = vpow.pop %v1100
        %v1102 = vmul.f32 %v1086, 1.442695
        %v1103 = vpow.pop %v1102
        %v1104 = vmul.f32 %v1087, 1.442695
        %v1105 = vpow.pop %v1104
        %v1106 = vmul.f32 %v1088, 1.442695
        %v1107 = vpow.pop %v1106
        %v1108 = vmul.f32 %v1089, 1.442695
        %v1109 = vpow.pop %v1108
        %v1110 = vmul.f32 %v1090, 1.442695
        %v1111 = vpow.pop %v1110
        %v1112 = vmul.f32 %v1091, 1.442695
        %v1113 = vpow.pop %v1112
        %v1114 = vmul.f32 %v1092, 1.442695
        %v1115 = vpow.pop %v1114
        %v1116 = vmul.f32 %v1093, 1.442695
        %v1117 = vpow.pop %v1116
        %v1118 = vmul.f32 %v1094, 1.442695
        %v1119 = vpow.pop %v1118
        %v1120 = vmul.f32 %v1095, 1.442695
        %v1121 = vpow.pop %v1120
        %v1122 = vsel %vm1043, %v1097, 0.0
        %1123 = vadd.xlane.f32.xlu0 %v1122
        %v1124 = vpop.xlane.xlu0 %1123
        %v1125 = vsel %vm1043, %v1099, 0.0
        %1126 = vadd.xlane.f32.xlu0 %v1125
        %v1127 = vpop.xlane.xlu0 %1126
        %v1128 = vsel %vm1043, %v1101, 0.0
        %1129 = vadd.xlane.f32.xlu0 %v1128
        %v1130 = vpop.xlane.xlu0 %1129
        %v1131 = vsel %vm1043, %v1103, 0.0
        %1132 = vadd.xlane.f32.xlu0 %v1131
        %v1133 = vpop.xlane.xlu0 %1132
        %v1134 = vsel %vm1043, %v1105, 0.0
        %1135 = vadd.xlane.f32.xlu0 %v1134
        %v1136 = vpop.xlane.xlu0 %1135
        %v1137 = vsel %vm1043, %v1107, 0.0
        %1138 = vadd.xlane.f32.xlu0 %v1137
        %v1139 = vpop.xlane.xlu0 %1138
        %v1140 = vsel %vm1043, %v1109, 0.0
        %1141 = vadd.xlane.f32.xlu0 %v1140
        %v1142 = vpop.xlane.xlu0 %1141
        %v1143 = vsel %vm1043, %v1111, 0.0
        %1144 = vadd.xlane.f32.xlu0 %v1143
        %v1145 = vpop.xlane.xlu0 %1144
        %v1146 = vsel %vm1043, %v1113, 0.0
        %1147 = vadd.xlane.f32.xlu0 %v1146
        %v1148 = vpop.xlane.xlu0 %1147
        %v1149 = vsel %vm1043, %v1115, 0.0
        %1150 = vadd.xlane.f32.xlu0 %v1149
        %v1151 = vpop.xlane.xlu0 %1150
        %v1152 = vsel %vm1043, %v1117, 0.0
        %1153 = vadd.xlane.f32.xlu0 %v1152
        %v1154 = vpop.xlane.xlu0 %1153
        %v1155 = vsel %vm1043, %v1119, 0.0
        %1156 = vadd.xlane.f32.xlu0 %v1155
        %v1157 = vpop.xlane.xlu0 %1156
        %v1158 = vsel %vm1043, %v1121, 0.0
        %1159 = vadd.xlane.f32.xlu0 %v1158
        %v1160 = vpop.xlane.xlu0 %1159
        %v1161 = vrcp.pop %v1124
        %v1162 = vrcp.pop %v1127
        %v1163 = vrcp.pop %v1130
        %v1164 = vrcp.pop %v1133
        %v1165 = vrcp.pop %v1136
        %v1166 = vrcp.pop %v1139
        %v1167 = vrcp.pop %v1142
        %v1168 = vrcp.pop %v1145
        %v1169 = vrcp.pop %v1148
        %v1170 = vrcp.pop %v1151
        %v1171 = vrcp.pop %v1154
        %v1172 = vrcp.pop %v1157
        %v1173 = vrcp.pop %v1160
        %v1174 = vmul.f32 %v1097, %v1161
        %v1175 = vmul.f32 %v1099, %v1162
        %v1176 = vmul.f32 %v1101, %v1163
        %v1177 = vmul.f32 %v1103, %v1164
        %v1178 = vmul.f32 %v1105, %v1165
        %v1179 = vmul.f32 %v1107, %v1166
        %v1180 = vmul.f32 %v1109, %v1167
        %v1181 = vmul.f32 %v1111, %v1168
        %v1182 = vmul.f32 %v1113, %v1169
        %v1183 = vmul.f32 %v1115, %v1170
        %v1184 = vmul.f32 %v1117, %v1171
        %v1185 = vmul.f32 %v1119, %v1172
        %v1186 = vmul.f32 %v1121, %v1173
        %v1187 = vld [vmem:[#allocation5] sm:$0xff]
        %v1188 = vld [vmem:[#allocation5 + $0x8] sm:$0xff]
        %v1189 = vld [vmem:[#allocation5 + $0x10] sm:$0xff]
        %v1190 = vld [vmem:[#allocation5 + $0x18] sm:$0xff]
        %v1191 = vld [vmem:[#allocation5 + $0x20] sm:$0xff]
        %v1192 = vld [vmem:[#allocation5 + $0x28] sm:$0xff]
        %v1193 = vld [vmem:[#allocation5 + $0x30] sm:$0xff]
        %v1194 = vld [vmem:[#allocation5 + $0x38] sm:$0xff]
        %v1196 = vsel %vm1043, %v1174, 0
        %v1199 = vsel %vm1043, %v1175, 0
        %v1202 = vsel %vm1043, %v1176, 0
        %v1205 = vsel %vm1043, %v1177, 0
        %v1208 = vsel %vm1043, %v1178, 0
        %v1211 = vsel %vm1043, %v1179, 0
        %v1214 = vsel %vm1043, %v1180, 0
        %v1217 = vsel %vm1043, %v1181, 0
        %v1220 = vsel %vm1043, %v1182, 0
        %v1223 = vsel %vm1043, %v1183, 0
        %v1226 = vsel %vm1043, %v1184, 0
        %v1229 = vsel %vm1043, %v1185, 0
        %v1232 = vsel %vm1043, %v1186, 0
        %1234 = vmatprep.subr.mxu0 %v1188
        %1235 = vmatpush1.msra.mxu0 %v1187
        %1236 = vmatprep.subr.mxu0 %v1192
        %1237 = vmatpush1.msra.mxu0 %v1191
        %1238 = vmatprep.subr.mxu0 0.0
        %1239 = vmatpush1.msra.mxu0 0.0
        %1240 = vmatprep.subr.mxu0 0.0
        %1241 = vmatpush1.msra.mxu0 0.0
        %1242 = vmatprep.subr.mxu0 0.0
        %1243 = vmatpush1.msra.mxu0 0.0
        %1244 = vmatprep.subr.mxu0 0.0
        %1245 = vmatpush1.msra.mxu0 0.0
        %1246 = vmatprep.subr.mxu0 0.0
        %1247 = vmatpush1.msra.mxu0 0.0
        %1248 = vmatprep.subr.mxu0 0.0
        %1249 = vmatpush1.msra.mxu0 0.0
        %1250 = vmatprep.subr.mxu0 0.0
        %1251 = vmatpush1.msra.mxu0 0.0
        %1252 = vmatprep.subr.mxu0 0.0
        %1253 = vmatpush1.msra.mxu0 0.0
        %1254 = vmatprep.subr.mxu0 0.0
        %1255 = vmatpush1.msra.mxu0 0.0
        %1256 = vmatprep.subr.mxu0 0.0
        %1257 = vmatpush1.msra.mxu0 0.0
        %1258 = vmatprep.subr.mxu0 0.0
        %1259 = vmatpush1.msra.mxu0 0.0
        %1260 = vmatprep.subr.mxu0 0.0
        %1261 = vmatpush1.msra.mxu0 0.0
        %1262 = vmatprep.subr.mxu0 0.0
        %1263 = vmatpush1.msra.mxu0 0.0
        %1264 = vmatprep.subr.mxu0 0.0
        %1265 = vmatpush1.msra.mxu0 0.0
        %1266 = vmatprep.subr.mxu0 0.0
        %1267 = vmatpush1.msra.mxu0 0.0
        %1268 = vmatprep.subr.mxu0 0.0
        %1269 = vmatpush1.msra.mxu0 0.0
        %1270 = vmatprep.subr.mxu0 0.0
        %1271 = vmatpush1.msra.mxu0 0.0
        %1272 = vmatprep.subr.mxu0 0.0
        %1273 = vmatpush1.msra.mxu0 0.0
        %1274 = vmatprep.subr.mxu0 0.0
        %1275 = vmatpush1.msra.mxu0 0.0
        %1276 = vmatprep.subr.mxu0 0.0
        %1277 = vmatpush1.msra.mxu0 0.0
        %1278 = vmatprep.subr.mxu0 0.0
        %1279 = vmatpush1.msra.mxu0 0.0
        %1280 = vmatprep.subr.mxu0 0.0
        %1281 = vmatpush1.msra.mxu0 0.0
        %1282 = vmatprep.subr.mxu0 0.0
        %1283 = vmatpush1.msra.mxu0 0.0
        %1284 = vmatprep.subr.mxu0 0.0
        %1285 = vmatpush1.msra.mxu0 0.0
        %1286 = vmatprep.subr.mxu0 0.0
        %1287 = vmatpush1.msra.mxu0 0.0
        %1288 = vmatprep.subr.mxu0 0.0
        %1289 = vmatpush1.msra.mxu0 0.0
        %1290 = vmatprep.subr.mxu0 0.0
        %1291 = vmatpush1.msra.mxu0 0.0
        %1292 = vmatprep.subr.mxu0 0.0
        %1293 = vmatpush1.msra.mxu0 0.0
        %1294 = vmatprep.subr.mxu0 0.0
        %1295 = vmatpush1.msra.mxu0 0.0
        %1296 = vmatprep.subr.mxu0 0.0
        %1297 = vmatpush1.msra.mxu0 0.0
        %1298 = vmatprep.mubr.f32.mxu0 0.0
        %1299 = vmatmul.mubr.f32.gmra.mrb[0].mxu0 %v1196
        %v1300 = vpop.f32.mrb[0].mxu0
        %v1301 = vadd.f32 0.0, %v1300
        %v1302 = vpop.f32.mrb[0].mxu0
        %v1303 = vadd.f32 0.0, %v1302
        %1304 = vmatprep.mubr.f32.mxu0 0.0
        %1305 = vmatmul.mubr.f32.gmra.mrb[0].mxu0 %v1199
        %v1306 = vpop.f32.mrb[0].mxu0
        %v1307 = vadd.f32 0.0, %v1306
        %v1308 = vpop.f32.mrb[0].mxu0
        %v1309 = vadd.f32 0.0, %v1308
        %1310 = vmatprep.mubr.f32.mxu0 0.0
        %1311 = vmatmul.mubr.f32.gmra.mrb[0].mxu0 %v1202
        %v1312 = vpop.f32.mrb[0].mxu0
        %v1313 = vadd.f32 0.0, %v1312
        %v1314 = vpop.f32.mrb[0].mxu0
        %v1315 = vadd.f32 0.0, %v1314
        %1316 = vmatprep.mubr.f32.mxu0 0.0
        %1317 = vmatmul.mubr.f32.gmra.mrb[0].mxu0 %v1205
        %v1318 = vpop.f32.mrb[0].mxu0
        %v1319 = vadd.f32 0.0, %v1318
        %v1320 = vpop.f32.mrb[0].mxu0
        %v1321 = vadd.f32 0.0, %v1320
        %1322 = vmatprep.mubr.f32.mxu0 0.0
        %1323 = vmatmul.mubr.f32.gmra.mrb[0].mxu0 %v1208
        %v1324 = vpop.f32.mrb[0].mxu0
        %v1325 = vadd.f32 0.0, %v1324
        %v1326 = vpop.f32.mrb[0].mxu0
        %v1327 = vadd.f32 0.0, %v1326
        %1328 = vmatprep.mubr.f32.mxu0 0.0
        %1329 = vmatmul.mubr.f32.gmra.mrb[0].mxu0 %v1211
        %v1330 = vpop.f32.mrb[0].mxu0
        %v1331 = vadd.f32 0.0, %v1330
        %v1332 = vpop.f32.mrb[0].mxu0
        %v1333 = vadd.f32 0.0, %v1332
        %1334 = vmatprep.mubr.f32.mxu0 0.0
        %1335 = vmatmul.mubr.f32.gmra.mrb[0].mxu0 %v1214
        %v1336 = vpop.f32.mrb[0].mxu0
        %v1337 = vadd.f32 0.0, %v1336
        %v1338 = vpop.f32.mrb[0].mxu0
        %v1339 = vadd.f32 0.0, %v1338
        %1340 = vmatprep.mubr.f32.mxu0 0.0
        %1341 = vmatmul.mubr.f32.gmra.mrb[0].mxu0 %v1217
        %v1342 = vpop.f32.mrb[0].mxu0
        %v1343 = vadd.f32 0.0, %v1342
        %v1344 = vpop.f32.mrb[0].mxu0
        %v1345 = vadd.f32 0.0, %v1344
        %1346 = vmatprep.mubr.f32.mxu0 0.0
        %1347 = vmatmul.mubr.f32.gmra.mrb[0].mxu0 %v1220
        %v1348 = vpop.f32.mrb[0].mxu0
        %v1349 = vadd.f32 0.0, %v1348
        %v1350 = vpop.f32.mrb[0].mxu0
        %v1351 = vadd.f32 0.0, %v1350
        %1352 = vmatprep.mubr.f32.mxu0 0.0
        %1353 = vmatmul.mubr.f32.gmra.mrb[0].mxu0 %v1223
        %v1354 = vpop.f32.mrb[0].mxu0
        %v1355 = vadd.f32 0.0, %v1354
        %v1356 = vpop.f32.mrb[0].mxu0
        %v1357 = vadd.f32 0.0, %v1356
        %1358 = vmatprep.mubr.f32.mxu0 0.0
        %1359 = vmatmul.mubr.f32.gmra.mrb[0].mxu0 %v1226
        %v1360 = vpop.f32.mrb[0].mxu0
        %v1361 = vadd.f32 0.0, %v1360
        %v1362 = vpop.f32.mrb[0].mxu0
        %v1363 = vadd.f32 0.0, %v1362
        %1364 = vmatprep.mubr.f32.mxu0 0.0
        %1365 = vmatmul.mubr.f32.gmra.mrb[0].mxu0 %v1229
        %v1366 = vpop.f32.mrb[0].mxu0
        %v1367 = vadd.f32 0.0, %v1366
        %v1368 = vpop.f32.mrb[0].mxu0
        %v1369 = vadd.f32 0.0, %v1368
        %1370 = vmatprep.mubr.f32.mxu0 0.0
        %1371 = vmatmul.mubr.f32.gmra.mrb[0].mxu0 %v1232
        %v1372 = vpop.f32.mrb[0].mxu0
        %v1373 = vadd.f32 0.0, %v1372
        %v1374 = vpop.f32.mrb[0].mxu0
        %v1375 = vadd.f32 0.0, %v1374
        %1376 = vdwg.mxu0
        %1377 = vmatprep.subr.mxu0 %v1190
        %1378 = vmatpush1.msra.mxu0 %v1189
        %1379 = vmatprep.subr.mxu0 %v1194
        %1380 = vmatpush1.msra.mxu0 %v1193
        %1381 = vmatprep.subr.mxu0 0.0
        %1382 = vmatpush1.msra.mxu0 0.0
        %1383 = vmatprep.subr.mxu0 0.0
        %1384 = vmatpush1.msra.mxu0 0.0
        %1385 = vmatprep.subr.mxu0 0.0
        %1386 = vmatpush1.msra.mxu0 0.0
        %1387 = vmatprep.subr.mxu0 0.0
        %1388 = vmatpush1.msra.mxu0 0.0
        %1389 = vmatprep.subr.mxu0 0.0
        %1390 = vmatpush1.msra.mxu0 0.0
        %1391 = vmatprep.subr.mxu0 0.0
        %1392 = vmatpush1.msra.mxu0 0.0
        %1393 = vmatprep.subr.mxu0 0.0
        %1394 = vmatpush1.msra.mxu0 0.0
        %1395 = vmatprep.subr.mxu0 0.0
        %1396 = vmatpush1.msra.mxu0 0.0
        %1397 = vmatprep.subr.mxu0 0.0
        %1398 = vmatpush1.msra.mxu0 0.0
        %1399 = vmatprep.subr.mxu0 0.0
        %1400 = vmatpush1.msra.mxu0 0.0
        %1401 = vmatprep.subr.mxu0 0.0
        %1402 = vmatpush1.msra.mxu0 0.0
        %1403 = vmatprep.subr.mxu0 0.0
        %1404 = vmatpush1.msra.mxu0 0.0
        %1405 = vmatprep.subr.mxu0 0.0
        %1406 = vmatpush1.msra.mxu0 0.0
        %1407 = vmatprep.subr.mxu0 0.0
        %1408 = vmatpush1.msra.mxu0 0.0
        %1409 = vmatprep.subr.mxu0 0.0
        %1410 = vmatpush1.msra.mxu0 0.0
        %1411 = vmatprep.subr.mxu0 0.0
        %1412 = vmatpush1.msra.mxu0 0.0
        %1413 = vmatprep.subr.mxu0 0.0
        %1414 = vmatpush1.msra.mxu0 0.0
        %1415 = vmatprep.subr.mxu0 0.0
        %1416 = vmatpush1.msra.mxu0 0.0
        %1417 = vmatprep.subr.mxu0 0.0
        %1418 = vmatpush1.msra.mxu0 0.0
        %1419 = vmatprep.subr.mxu0 0.0
        %1420 = vmatpush1.msra.mxu0 0.0
        %1421 = vmatprep.subr.mxu0 0.0
        %1422 = vmatpush1.msra.mxu0 0.0
        %1423 = vmatprep.subr.mxu0 0.0
        %1424 = vmatpush1.msra.mxu0 0.0
        %1425 = vmatprep.subr.mxu0 0.0
        %1426 = vmatpush1.msra.mxu0 0.0
        %1427 = vmatprep.subr.mxu0 0.0
        %1428 = vmatpush1.msra.mxu0 0.0
        %1429 = vmatprep.subr.mxu0 0.0
        %1430 = vmatpush1.msra.mxu0 0.0
        %1431 = vmatprep.subr.mxu0 0.0
        %1432 = vmatpush1.msra.mxu0 0.0
        %1433 = vmatprep.subr.mxu0 0.0
        %1434 = vmatpush1.msra.mxu0 0.0
        %1435 = vmatprep.subr.mxu0 0.0
        %1436 = vmatpush1.msra.mxu0 0.0
        %1437 = vmatprep.subr.mxu0 0.0
        %1438 = vmatpush1.msra.mxu0 0.0
        %1439 = vmatprep.subr.mxu0 0.0
        %1440 = vmatpush1.msra.mxu0 0.0
        %1441 = vmatprep.mubr.f32.mxu0 0.0
        %1442 = vmatmul.mubr.f32.gmra.mrb[0].mxu0 %v1196
        %v1443 = vpop.f32.mrb[0].mxu0
        %v1444 = vadd.f32 0.0, %v1443
        %v1445 = vpop.f32.mrb[0].mxu0
        %v1446 = vadd.f32 0.0, %v1445
        %1447 = vmatprep.mubr.f32.mxu0 0.0
        %1448 = vmatmul.mubr.f32.gmra.mrb[0].mxu0 %v1199
        %v1449 = vpop.f32.mrb[0].mxu0
        %v1450 = vadd.f32 0.0, %v1449
        %v1451 = vpop.f32.mrb[0].mxu0
        %v1452 = vadd.f32 0.0, %v1451
        %1453 = vmatprep.mubr.f32.mxu0 0.0
        %1454 = vmatmul.mubr.f32.gmra.mrb[0].mxu0 %v1202
        %v1455 = vpop.f32.mrb[0].mxu0
        %v1456 = vadd.f32 0.0, %v1455
        %v1457 = vpop.f32.mrb[0].mxu0
        %v1458 = vadd.f32 0.0, %v1457
        %1459 = vmatprep.mubr.f32.mxu0 0.0
        %1460 = vmatmul.mubr.f32.gmra.mrb[0].mxu0 %v1205
        %v1461 = vpop.f32.mrb[0].mxu0
        %v1462 = vadd.f32 0.0, %v1461
        %v1463 = vpop.f32.mrb[0].mxu0
        %v1464 = vadd.f32 0.0, %v1463
        %1465 = vmatprep.mubr.f32.mxu0 0.0
        %1466 = vmatmul.mubr.f32.gmra.mrb[0].mxu0 %v1208
        %v1467 = vpop.f32.mrb[0].mxu0
        %v1468 = vadd.f32 0.0, %v1467
        %v1469 = vpop.f32.mrb[0].mxu0
        %v1470 = vadd.f32 0.0, %v1469
        %1471 = vmatprep.mubr.f32.mxu0 0.0
        %1472 = vmatmul.mubr.f32.gmra.mrb[0].mxu0 %v1211
        %v1473 = vpop.f32.mrb[0].mxu0
        %v1474 = vadd.f32 0.0, %v1473
        %v1475 = vpop.f32.mrb[0].mxu0
        %v1476 = vadd.f32 0.0, %v1475
        %1477 = vmatprep.mubr.f32.mxu0 0.0
        %1478 = vmatmul.mubr.f32.gmra.mrb[0].mxu0 %v1214
        %v1479 = vpop.f32.mrb[0].mxu0
        %v1480 = vadd.f32 0.0, %v1479
        %v1481 = vpop.f32.mrb[0].mxu0
        %v1482 = vadd.f32 0.0, %v1481
        %1483 = vmatprep.mubr.f32.mxu0 0.0
        %1484 = vmatmul.mubr.f32.gmra.mrb[0].mxu0 %v1217
        %v1485 = vpop.f32.mrb[0].mxu0
        %v1486 = vadd.f32 0.0, %v1485
        %v1487 = vpop.f32.mrb[0].mxu0
        %v1488 = vadd.f32 0.0, %v1487
        %1489 = vmatprep.mubr.f32.mxu0 0.0
        %1490 = vmatmul.mubr.f32.gmra.mrb[0].mxu0 %v1220
        %v1491 = vpop.f32.mrb[0].mxu0
        %v1492 = vadd.f32 0.0, %v1491
        %v1493 = vpop.f32.mrb[0].mxu0
        %v1494 = vadd.f32 0.0, %v1493
        %1495 = vmatprep.mubr.f32.mxu0 0.0
        %1496 = vmatmul.mubr.f32.gmra.mrb[0].mxu0 %v1223
        %v1497 = vpop.f32.mrb[0].mxu0
        %v1498 = vadd.f32 0.0, %v1497
        %v1499 = vpop.f32.mrb[0].mxu0
        %v1500 = vadd.f32 0.0, %v1499
        %1501 = vmatprep.mubr.f32.mxu0 0.0
        %1502 = vmatmul.mubr.f32.gmra.mrb[0].mxu0 %v1226
        %v1503 = vpop.f32.mrb[0].mxu0
        %v1504 = vadd.f32 0.0, %v1503
        %v1505 = vpop.f32.mrb[0].mxu0
        %v1506 = vadd.f32 0.0, %v1505
        %1507 = vmatprep.mubr.f32.mxu0 0.0
        %1508 = vmatmul.mubr.f32.gmra.mrb[0].mxu0 %v1229
        %v1509 = vpop.f32.mrb[0].mxu0
        %v1510 = vadd.f32 0.0, %v1509
        %v1511 = vpop.f32.mrb[0].mxu0
        %v1512 = vadd.f32 0.0, %v1511
        %1513 = vmatprep.mubr.f32.mxu0 0.0
        %1514 = vmatmul.mubr.f32.gmra.mrb[0].mxu0 %v1232
        %v1515 = vpop.f32.mrb[0].mxu0
        %v1516 = vadd.f32 0.0, %v1515
        %v1517 = vpop.f32.mrb[0].mxu0
        %v1518 = vadd.f32 0.0, %v1517
        %1519 = vdwg.mxu0
        %v1520 = vmul.f32 %v367, %v1301
        %v1521 = vmul.f32 %v368, %v1303
        %v1522 = vmul.f32 %v369, %v1444
        %v1523 = vmul.f32 %v370, %v1446
        %v1524 = vmul.f32 %v371, %v1307
        %v1525 = vmul.f32 %v372, %v1309
        %v1526 = vmul.f32 %v373, %v1450
        %v1527 = vmul.f32 %v374, %v1452
        %v1528 = vmul.f32 %v375, %v1313
        %v1529 = vmul.f32 %v376, %v1315
        %v1530 = vmul.f32 %v377, %v1456
        %v1531 = vmul.f32 %v378, %v1458
        %v1532 = vmul.f32 %v379, %v1319
        %v1533 = vmul.f32 %v380, %v1321
        %v1534 = vmul.f32 %v381, %v1462
        %v1535 = vmul.f32 %v382, %v1464
        %v1536 = vmul.f32 %v383, %v1325
        %v1537 = vmul.f32 %v384, %v1327
        %v1538 = vmul.f32 %v385, %v1468
        %v1539 = vmul.f32 %v386, %v1470
        %v1540 = vmul.f32 %v387, %v1331
        %v1541 = vmul.f32 %v388, %v1333
        %v1542 = vmul.f32 %v389, %v1474
        %v1543 = vmul.f32 %v390, %v1476
        %v1544 = vmul.f32 %v391, %v1337
        %v1545 = vmul.f32 %v392, %v1339
        %v1546 = vmul.f32 %v393, %v1480
        %v1547 = vmul.f32 %v394, %v1482
        %v1548 = vmul.f32 %v395, %v1343
        %v1549 = vmul.f32 %v396, %v1345
        %v1550 = vmul.f32 %v397, %v1486
        %v1551 = vmul.f32 %v398, %v1488
        %v1552 = vmul.f32 %v399, %v1349
        %v1553 = vmul.f32 %v400, %v1351
        %v1554 = vmul.f32 %v401, %v1492
        %v1555 = vmul.f32 %v402, %v1494
        %v1556 = vmul.f32 %v403, %v1355
        %v1557 = vmul.f32 %v404, %v1357
        %v1558 = vmul.f32 %v405, %v1498
        %v1559 = vmul.f32 %v406, %v1500
        %v1560 = vmul.f32 %v407, %v1361
        %v1561 = vmul.f32 %v408, %v1363
        %v1562 = vmul.f32 %v409, %v1504
        %v1563 = vmul.f32 %v410, %v1506
        %v1564 = vmul.f32 %v411, %v1367
        %v1565 = vmul.f32 %v412, %v1369
        %v1566 = vmul.f32 %v413, %v1510
        %v1567 = vmul.f32 %v414, %v1512
        %v1568 = vmul.f32 %v415, %v1373
        %v1569 = vmul.f32 %v416, %v1375
        %v1570 = vmul.f32 %v417, %v1516
        %v1571 = vmul.f32 %v418, %v1518
        %v1572 = vld [vmem:[%s6] sm:$0xff]
        %v1573 = vld [vmem:[%s6 + $0x8] sm:$0xff]
        %v1574 = vld [vmem:[%s6 + $0x10] sm:$0xff]
        %v1575 = vld [vmem:[%s6 + $0x18] sm:$0xff]
        %v1576 = vld [vmem:[%s6 + $0x20] sm:$0xff]
        %v1577 = vld [vmem:[%s6 + $0x28] sm:$0xff]
        %v1578 = vld [vmem:[%s6 + $0x30] sm:$0xff]
        %v1579 = vld [vmem:[%s6 + $0x38] sm:$0xff]
        %v1580 = vld [vmem:[%s6 + $0x40] sm:$0xff]
        %v1581 = vld [vmem:[%s6 + $0x48] sm:$0xff]
        %v1582 = vld [vmem:[%s6 + $0x50] sm:$0xff]
        %v1583 = vld [vmem:[%s6 + $0x58] sm:$0xff]
        %v1584 = vld [vmem:[%s6 + $0x60] sm:$0xff]
        %v1585 = vld [vmem:[%s6 + $0x68] sm:$0xff]
        %v1586 = vld [vmem:[%s6 + $0x70] sm:$0xff]
        %v1587 = vld [vmem:[%s6 + $0x78] sm:$0xff]
        %v1588 = vld [vmem:[%s6 + $0x80] sm:$0xff]
        %v1589 = vld [vmem:[%s6 + $0x88] sm:$0xff]
        %v1590 = vld [vmem:[%s6 + $0x90] sm:$0xff]
        %v1591 = vld [vmem:[%s6 + $0x98] sm:$0xff]
        %v1592 = vld [vmem:[%s6 + $0xa0] sm:$0xff]
        %v1593 = vld [vmem:[%s6 + $0xa8] sm:$0xff]
        %v1594 = vld [vmem:[%s6 + $0xb0] sm:$0xff]
        %v1595 = vld [vmem:[%s6 + $0xb8] sm:$0xff]
        %v1596 = vld [vmem:[%s6 + $0xc0] sm:$0xff]
        %v1597 = vld [vmem:[%s6 + $0xc8] sm:$0xff]
        %v1598 = vld [vmem:[%s6 + $0xd0] sm:$0xff]
        %v1599 = vld [vmem:[%s6 + $0xd8] sm:$0xff]
        %v1600 = vld [vmem:[%s6 + $0xe0] sm:$0xff]
        %v1601 = vld [vmem:[%s6 + $0xe8] sm:$0xff]
        %v1602 = vld [vmem:[%s6 + $0xf0] sm:$0xff]
        %v1603 = vld [vmem:[%s6 + $0xf8] sm:$0xff]
        %v1604 = vld [vmem:[%s6 + $0x100] sm:$0xff]
        %v1605 = vld [vmem:[%s6 + $0x108] sm:$0xff]
        %v1606 = vld [vmem:[%s6 + $0x110] sm:$0xff]
        %v1607 = vld [vmem:[%s6 + $0x118] sm:$0xff]
        %v1608 = vld [vmem:[%s6 + $0x120] sm:$0xff]
        %v1609 = vld [vmem:[%s6 + $0x128] sm:$0xff]
        %v1610 = vld [vmem:[%s6 + $0x130] sm:$0xff]
        %v1611 = vld [vmem:[%s6 + $0x138] sm:$0xff]
        %v1612 = vld [vmem:[%s6 + $0x140] sm:$0xff]
        %v1613 = vld [vmem:[%s6 + $0x148] sm:$0xff]
        %v1614 = vld [vmem:[%s6 + $0x150] sm:$0xff]
        %v1615 = vld [vmem:[%s6 + $0x158] sm:$0xff]
        %v1616 = vld [vmem:[%s6 + $0x160] sm:$0xff]
        %v1617 = vld [vmem:[%s6 + $0x168] sm:$0xff]
        %v1618 = vld [vmem:[%s6 + $0x170] sm:$0xff]
        %v1619 = vld [vmem:[%s6 + $0x178] sm:$0xff]
        %v1620 = vld [vmem:[%s6 + $0x180] sm:$0xff]
        %v1621 = vld [vmem:[%s6 + $0x188] sm:$0xff]
        %v1622 = vld [vmem:[%s6 + $0x190] sm:$0xff]
        %v1623 = vld [vmem:[%s6 + $0x198] sm:$0xff]
        %v1624 = vld [vmem:[%s6 + $0x1a0] sm:$0xff]
        %v1625 = vld [vmem:[%s6 + $0x1a8] sm:$0xff]
        %v1626 = vld [vmem:[%s6 + $0x1b0] sm:$0xff]
        %v1627 = vld [vmem:[%s6 + $0x1b8] sm:$0xff]
        %v1628 = vld [vmem:[%s6 + $0x1c0] sm:$0xff]
        %v1629 = vld [vmem:[%s6 + $0x1c8] sm:$0xff]
        %v1630 = vld [vmem:[%s6 + $0x1d0] sm:$0xff]
        %v1631 = vld [vmem:[%s6 + $0x1d8] sm:$0xff]
        %v1632 = vld [vmem:[%s6 + $0x1e0] sm:$0xff]
        %v1633 = vld [vmem:[%s6 + $0x1e8] sm:$0xff]
        %v1634 = vld [vmem:[%s6 + $0x1f0] sm:$0xff]
        %v1635 = vld [vmem:[%s6 + $0x1f8] sm:$0xff]
        %v1636 = vld [vmem:[%s7] sm:$0x1]
        %v1638 = vlaneseq
        %v1639 = vshrl.u32 %v1638, 7
        %v1640 = vsub.s32 0, %v1639
        %v1641 = vrot.slane %v1636, %v1640
        %1643 = vmatprep.subr.mxu0 0.0
        %1644 = vmatpush1.msra.mxu0 %v1572
        %1645 = vmatprep.subr.mxu0 0.0
        %1646 = vmatpush1.msra.mxu0 %v1573
        %1647 = vmatprep.subr.mxu0 0.0
        %1648 = vmatpush1.msra.mxu0 %v1574
        %1649 = vmatprep.subr.mxu0 0.0
        %1650 = vmatpush1.msra.mxu0 %v1575
        %1651 = vmatprep.subr.mxu0 0.0
        %1652 = vmatpush1.msra.mxu0 %v1576
        %1653 = vmatprep.subr.mxu0 0.0
        %1654 = vmatpush1.msra.mxu0 %v1577
        %1655 = vmatprep.subr.mxu0 0.0
        %1656 = vmatpush1.msra.mxu0 %v1578
        %1657 = vmatprep.subr.mxu0 0.0
        %1658 = vmatpush1.msra.mxu0 %v1579
        %1659 = vmatprep.subr.mxu0 0.0
        %1660 = vmatpush1.msra.mxu0 %v1580
        %1661 = vmatprep.subr.mxu0 0.0
        %1662 = vmatpush1.msra.mxu0 %v1581
        %1663 = vmatprep.subr.mxu0 0.0
        %1664 = vmatpush1.msra.mxu0 %v1582
        %1665 = vmatprep.subr.mxu0 0.0
        %1666 = vmatpush1.msra.mxu0 %v1583
        %1667 = vmatprep.subr.mxu0 0.0
        %1668 = vmatpush1.msra.mxu0 %v1584
        %1669 = vmatprep.subr.mxu0 0.0
        %1670 = vmatpush1.msra.mxu0 %v1585
        %1671 = vmatprep.subr.mxu0 0.0
        %1672 = vmatpush1.msra.mxu0 %v1586
        %1673 = vmatprep.subr.mxu0 0.0
        %1674 = vmatpush1.msra.mxu0 %v1587
        %1675 = vmatprep.subr.mxu0 0.0
        %1676 = vmatpush1.msra.mxu0 %v1588
        %1677 = vmatprep.subr.mxu0 0.0
        %1678 = vmatpush1.msra.mxu0 %v1589
        %1679 = vmatprep.subr.mxu0 0.0
        %1680 = vmatpush1.msra.mxu0 %v1590
        %1681 = vmatprep.subr.mxu0 0.0
        %1682 = vmatpush1.msra.mxu0 %v1591
        %1683 = vmatprep.subr.mxu0 0.0
        %1684 = vmatpush1.msra.mxu0 %v1592
        %1685 = vmatprep.subr.mxu0 0.0
        %1686 = vmatpush1.msra.mxu0 %v1593
        %1687 = vmatprep.subr.mxu0 0.0
        %1688 = vmatpush1.msra.mxu0 %v1594
        %1689 = vmatprep.subr.mxu0 0.0
        %1690 = vmatpush1.msra.mxu0 %v1595
        %1691 = vmatprep.subr.mxu0 0.0
        %1692 = vmatpush1.msra.mxu0 %v1596
        %1693 = vmatprep.subr.mxu0 0.0
        %1694 = vmatpush1.msra.mxu0 %v1597
        %1695 = vmatprep.subr.mxu0 0.0
        %1696 = vmatpush1.msra.mxu0 %v1598
        %1697 = vmatprep.subr.mxu0 0.0
        %1698 = vmatpush1.msra.mxu0 %v1599
        %1699 = vmatprep.subr.mxu0 0.0
        %1700 = vmatpush1.msra.mxu0 %v1600
        %1701 = vmatprep.subr.mxu0 0.0
        %1702 = vmatpush1.msra.mxu0 %v1601
        %1703 = vmatprep.subr.mxu0 0.0
        %1704 = vmatpush1.msra.mxu0 %v1602
        %1705 = vmatprep.subr.mxu0 0.0
        %1706 = vmatpush1.msra.mxu0 %v1603
        %1707 = vmatprep.mubr.f32.mxu0 %v1521
        %1708 = vmatmul.mubr.f32.gmra.mrb[0].mxu0 %v1520
        %v1709 = vpop.f32.mrb[0].mxu0
        %v1710 = vadd.f32 %v1641, %v1709
        %v1711 = vpop.f32.mrb[0].mxu0
        %1712 = vmatprep.mubr.f32.mxu0 %v1525
        %1713 = vmatmul.mubr.f32.gmra.mrb[0].mxu0 %v1524
        %v1714 = vpop.f32.mrb[0].mxu0
        %v1715 = vadd.f32 %v1641, %v1714
        %v1716 = vpop.f32.mrb[0].mxu0
        %1717 = vmatprep.mubr.f32.mxu0 %v1529
        %1718 = vmatmul.mubr.f32.gmra.mrb[0].mxu0 %v1528
        %v1719 = vpop.f32.mrb[0].mxu0
        %v1720 = vadd.f32 %v1641, %v1719
        %v1721 = vpop.f32.mrb[0].mxu0
        %1722 = vmatprep.mubr.f32.mxu0 %v1533
        %1723 = vmatmul.mubr.f32.gmra.mrb[0].mxu0 %v1532
        %v1724 = vpop.f32.mrb[0].mxu0
        %v1725 = vadd.f32 %v1641, %v1724
        %v1726 = vpop.f32.mrb[0].mxu0
        %1727 = vmatprep.mubr.f32.mxu0 %v1537
        %1728 = vmatmul.mubr.f32.gmra.mrb[0].mxu0 %v1536
        %v1729 = vpop.f32.mrb[0].mxu0
        %v1730 = vadd.f32 %v1641, %v1729
        %v1731 = vpop.f32.mrb[0].mxu0
        %1732 = vmatprep.mubr.f32.mxu0 %v1541
        %1733 = vmatmul.mubr.f32.gmra.mrb[0].mxu0 %v1540
        %v1734 = vpop.f32.mrb[0].mxu0
        %v1735 = vadd.f32 %v1641, %v1734
        %v1736 = vpop.f32.mrb[0].mxu0
        %1737 = vmatprep.mubr.f32.mxu0 %v1545
        %1738 = vmatmul.mubr.f32.gmra.mrb[0].mxu0 %v1544
        %v1739 = vpop.f32.mrb[0].mxu0
        %v1740 = vadd.f32 %v1641, %v1739
        %v1741 = vpop.f32.mrb[0].mxu0
        %1742 = vmatprep.mubr.f32.mxu0 %v1549
        %1743 = vmatmul.mubr.f32.gmra.mrb[0].mxu0 %v1548
        %v1744 = vpop.f32.mrb[0].mxu0
        %v1745 = vadd.f32 %v1641, %v1744
        %v1746 = vpop.f32.mrb[0].mxu0
        %1747 = vmatprep.mubr.f32.mxu0 %v1553
        %1748 = vmatmul.mubr.f32.gmra.mrb[0].mxu0 %v1552
        %v1749 = vpop.f32.mrb[0].mxu0
        %v1750 = vadd.f32 %v1641, %v1749
        %v1751 = vpop.f32.mrb[0].mxu0
        %1752 = vmatprep.mubr.f32.mxu0 %v1557
        %1753 = vmatmul.mubr.f32.gmra.mrb[0].mxu0 %v1556
        %v1754 = vpop.f32.mrb[0].mxu0
        %v1755 = vadd.f32 %v1641, %v1754
        %v1756 = vpop.f32.mrb[0].mxu0
        %1757 = vmatprep.mubr.f32.mxu0 %v1561
        %1758 = vmatmul.mubr.f32.gmra.mrb[0].mxu0 %v1560
        %v1759 = vpop.f32.mrb[0].mxu0
        %v1760 = vadd.f32 %v1641, %v1759
        %v1761 = vpop.f32.mrb[0].mxu0
        %1762 = vmatprep.mubr.f32.mxu0 %v1565
        %1763 = vmatmul.mubr.f32.gmra.mrb[0].mxu0 %v1564
        %v1764 = vpop.f32.mrb[0].mxu0
        %v1765 = vadd.f32 %v1641, %v1764
        %v1766 = vpop.f32.mrb[0].mxu0
        %1767 = vmatprep.mubr.f32.mxu0 %v1569
        %1768 = vmatmul.mubr.f32.gmra.mrb[0].mxu0 %v1568
        %v1769 = vpop.f32.mrb[0].mxu0
        %v1770 = vadd.f32 %v1641, %v1769
        %v1771 = vpop.f32.mrb[0].mxu0
        %1772 = vdwg.mxu0
        %1773 = vmatprep.subr.mxu0 0.0
        %1774 = vmatpush1.msra.mxu0 %v1604
        %1775 = vmatprep.subr.mxu0 0.0
        %1776 = vmatpush1.msra.mxu0 %v1605
        %1777 = vmatprep.subr.mxu0 0.0
        %1778 = vmatpush1.msra.mxu0 %v1606
        %1779 = vmatprep.subr.mxu0 0.0
        %1780 = vmatpush1.msra.mxu0 %v1607
        %1781 = vmatprep.subr.mxu0 0.0
        %1782 = vmatpush1.msra.mxu0 %v1608
        %1783 = vmatprep.subr.mxu0 0.0
        %1784 = vmatpush1.msra.mxu0 %v1609
        %1785 = vmatprep.subr.mxu0 0.0
        %1786 = vmatpush1.msra.mxu0 %v1610
        %1787 = vmatprep.subr.mxu0 0.0
        %1788 = vmatpush1.msra.mxu0 %v1611
        %1789 = vmatprep.subr.mxu0 0.0
        %1790 = vmatpush1.msra.mxu0 %v1612
        %1791 = vmatprep.subr.mxu0 0.0
        %1792 = vmatpush1.msra.mxu0 %v1613
        %1793 = vmatprep.subr.mxu0 0.0
        %1794 = vmatpush1.msra.mxu0 %v1614
        %1795 = vmatprep.subr.mxu0 0.0
        %1796 = vmatpush1.msra.mxu0 %v1615
        %1797 = vmatprep.subr.mxu0 0.0
        %1798 = vmatpush1.msra.mxu0 %v1616
        %1799 = vmatprep.subr.mxu0 0.0
        %1800 = vmatpush1.msra.mxu0 %v1617
        %1801 = vmatprep.subr.mxu0 0.0
        %1802 = vmatpush1.msra.mxu0 %v1618
        %1803 = vmatprep.subr.mxu0 0.0
        %1804 = vmatpush1.msra.mxu0 %v1619
        %1805 = vmatprep.subr.mxu0 0.0
        %1806 = vmatpush1.msra.mxu0 %v1620
        %1807 = vmatprep.subr.mxu0 0.0
        %1808 = vmatpush1.msra.mxu0 %v1621
        %1809 = vmatprep.subr.mxu0 0.0
        %1810 = vmatpush1.msra.mxu0 %v1622
        %1811 = vmatprep.subr.mxu0 0.0
        %1812 = vmatpush1.msra.mxu0 %v1623
        %1813 = vmatprep.subr.mxu0 0.0
        %1814 = vmatpush1.msra.mxu0 %v1624
        %1815 = vmatprep.subr.mxu0 0.0
        %1816 = vmatpush1.msra.mxu0 %v1625
        %1817 = vmatprep.subr.mxu0 0.0
        %1818 = vmatpush1.msra.mxu0 %v1626
        %1819 = vmatprep.subr.mxu0 0.0
        %1820 = vmatpush1.msra.mxu0 %v1627
        %1821 = vmatprep.subr.mxu0 0.0
        %1822 = vmatpush1.msra.mxu0 %v1628
        %1823 = vmatprep.subr.mxu0 0.0
        %1824 = vmatpush1.msra.mxu0 %v1629
        %1825 = vmatprep.subr.mxu0 0.0
        %1826 = vmatpush1.msra.mxu0 %v1630
        %1827 = vmatprep.subr.mxu0 0.0
        %1828 = vmatpush1.msra.mxu0 %v1631
        %1829 = vmatprep.subr.mxu0 0.0
        %1830 = vmatpush1.msra.mxu0 %v1632
        %1831 = vmatprep.subr.mxu0 0.0
        %1832 = vmatpush1.msra.mxu0 %v1633
        %1833 = vmatprep.subr.mxu0 0.0
        %1834 = vmatpush1.msra.mxu0 %v1634
        %1835 = vmatprep.subr.mxu0 0.0
        %1836 = vmatpush1.msra.mxu0 %v1635
        %1837 = vmatprep.mubr.f32.mxu0 %v1523
        %1838 = vmatmul.mubr.f32.gmra.mrb[0].mxu0 %v1522
        %v1839 = vpop.f32.mrb[0].mxu0
        %v1840 = vadd.f32 %v1710, %v1839
        %v1841 = vpop.f32.mrb[0].mxu0
        %1842 = vmatprep.mubr.f32.mxu0 %v1527
        %1843 = vmatmul.mubr.f32.gmra.mrb[0].mxu0 %v1526
        %v1844 = vpop.f32.mrb[0].mxu0
        %v1845 = vadd.f32 %v1715, %v1844
        %v1846 = vpop.f32.mrb[0].mxu0
        %1847 = vmatprep.mubr.f32.mxu0 %v1531
        %1848 = vmatmul.mubr.f32.gmra.mrb[0].mxu0 %v1530
        %v1849 = vpop.f32.mrb[0].mxu0
        %v1850 = vadd.f32 %v1720, %v1849
        %v1851 = vpop.f32.mrb[0].mxu0
        %1852 = vmatprep.mubr.f32.mxu0 %v1535
        %1853 = vmatmul.mubr.f32.gmra.mrb[0].mxu0 %v1534
        %v1854 = vpop.f32.mrb[0].mxu0
        %v1855 = vadd.f32 %v1725, %v1854
        %v1856 = vpop.f32.mrb[0].mxu0
        %1857 = vmatprep.mubr.f32.mxu0 %v1539
        %1858 = vmatmul.mubr.f32.gmra.mrb[0].mxu0 %v1538
        %v1859 = vpop.f32.mrb[0].mxu0
        %v1860 = vadd.f32 %v1730, %v1859
        %v1861 = vpop.f32.mrb[0].mxu0
        %1862 = vmatprep.mubr.f32.mxu0 %v1543
        %1863 = vmatmul.mubr.f32.gmra.mrb[0].mxu0 %v1542
        %v1864 = vpop.f32.mrb[0].mxu0
        %v1865 = vadd.f32 %v1735, %v1864
        %v1866 = vpop.f32.mrb[0].mxu0
        %1867 = vmatprep.mubr.f32.mxu0 %v1547
        %1868 = vmatmul.mubr.f32.gmra.mrb[0].mxu0 %v1546
        %v1869 = vpop.f32.mrb[0].mxu0
        %v1870 = vadd.f32 %v1740, %v1869
        %v1871 = vpop.f32.mrb[0].mxu0
        %1872 = vmatprep.mubr.f32.mxu0 %v1551
        %1873 = vmatmul.mubr.f32.gmra.mrb[0].mxu0 %v1550
        %v1874 = vpop.f32.mrb[0].mxu0
        %v1875 = vadd.f32 %v1745, %v1874
        %v1876 = vpop.f32.mrb[0].mxu0
        %1877 = vmatprep.mubr.f32.mxu0 %v1555
        %1878 = vmatmul.mubr.f32.gmra.mrb[0].mxu0 %v1554
        %v1879 = vpop.f32.mrb[0].mxu0
        %v1880 = vadd.f32 %v1750, %v1879
        %v1881 = vpop.f32.mrb[0].mxu0
        %1882 = vmatprep.mubr.f32.mxu0 %v1559
        %1883 = vmatmul.mubr.f32.gmra.mrb[0].mxu0 %v1558
        %v1884 = vpop.f32.mrb[0].mxu0
        %v1885 = vadd.f32 %v1755, %v1884
        %v1886 = vpop.f32.mrb[0].mxu0
        %1887 = vmatprep.mubr.f32.mxu0 %v1563
        %1888 = vmatmul.mubr.f32.gmra.mrb[0].mxu0 %v1562
        %v1889 = vpop.f32.mrb[0].mxu0
        %v1890 = vadd.f32 %v1760, %v1889
        %v1891 = vpop.f32.mrb[0].mxu0
        %1892 = vmatprep.mubr.f32.mxu0 %v1567
        %1893 = vmatmul.mubr.f32.gmra.mrb[0].mxu0 %v1566
        %v1894 = vpop.f32.mrb[0].mxu0
        %v1895 = vadd.f32 %v1765, %v1894
        %v1896 = vpop.f32.mrb[0].mxu0
        %1897 = vmatprep.mubr.f32.mxu0 %v1571
        %1898 = vmatmul.mubr.f32.gmra.mrb[0].mxu0 %v1570
        %v1899 = vpop.f32.mrb[0].mxu0
        %v1900 = vadd.f32 %v1770, %v1899
        %v1901 = vpop.f32.mrb[0].mxu0
        %1902 = vdwg.mxu0
        %v1903 = vmax.f32 %v1840, 0.0
        %v1904 = vmax.f32 %v1845, 0.0
        %v1905 = vmax.f32 %v1850, 0.0
        %v1906 = vmax.f32 %v1855, 0.0
        %v1907 = vmax.f32 %v1860, 0.0
        %v1908 = vmax.f32 %v1865, 0.0
        %v1909 = vmax.f32 %v1870, 0.0
        %v1910 = vmax.f32 %v1875, 0.0
        %v1911 = vmax.f32 %v1880, 0.0
        %v1912 = vmax.f32 %v1885, 0.0
        %v1913 = vmax.f32 %v1890, 0.0
        %v1914 = vmax.f32 %v1895, 0.0
        %v1915 = vmax.f32 %v1900, 0.0
        %1916 = vst.msk [vmem:[%s344] sm:$0xff] %vm1043, %v1903
        %1917 = vst.msk [vmem:[%s344 + $0x8] sm:$0xff] %vm1043, %v1904
        %1918 = vst.msk [vmem:[%s344 + $0x10] sm:$0xff] %vm1043, %v1905
        %1919 = vst.msk [vmem:[%s344 + $0x18] sm:$0xff] %vm1043, %v1906
        %1920 = vst.msk [vmem:[%s344 + $0x20] sm:$0xff] %vm1043, %v1907
        %1921 = vst.msk [vmem:[%s344 + $0x28] sm:$0xff] %vm1043, %v1908
        %1922 = vst.msk [vmem:[%s344 + $0x30] sm:$0xff] %vm1043, %v1909
        %1923 = vst.msk [vmem:[%s344 + $0x38] sm:$0xff] %vm1043, %v1910
        %1924 = vst.msk [vmem:[%s344 + $0x40] sm:$0xff] %vm1043, %v1911
        %1925 = vst.msk [vmem:[%s344 + $0x48] sm:$0xff] %vm1043, %v1912
        %1926 = vst.msk [vmem:[%s344 + $0x50] sm:$0xff] %vm1043, %v1913
        %1927 = vst.msk [vmem:[%s344 + $0x58] sm:$0xff] %vm1043, %v1914
        %1928 = vst.msk [vmem:[%s344 + $0x60] sm:$0xff] %vm1043, %v1915
        %s1929 = sand.u32 %s204, 1
        %s1930 = sand.u32 %s204, 1
        %s1931 = smul.addr %s1930, 104
        %s1932 = scalar_lea.vmem [#allocation7], %s1931
        // Predicated region
        $region61: #{tpu_custom_call.1} parent=51 // pred_check
          %p1933 = pneg %p214
        $region62: #{tpu_custom_call.1} parent=51 // pred_check_branch
          %1935 = sbr.rel (%p1933) target = $region64
        $region63: #{tpu_custom_call.1} parent=51 // pred_region
          %s1936 = smul.u32 13, %s23
          %s1937 = ssub.s32 25, %s1936
          %p1938 = scmp.lt.s32.totalorder %s1937, 13
          %s1939 = scalar_select %p1938, %s1937, 13
          %s1940 = smul.u32 128, %s1939
          %p1941 = scmp.ne.s32.totalorder 0, %s1940
          %s1942 = smul.addr %s1936, 8
          %s1943 = scalar_lea.vmem %s8, %s1942
          // Predicated region
          $region65: #{tpu_custom_call.1} parent=63 // pred_check
            %p1944 = pneg %p1941
          $region66: #{tpu_custom_call.1} parent=63 // pred_check_branch
            %1946 = sbr.rel (%p1944) target = $region68
          $region67: #{tpu_custom_call.1} parent=63 // pred_region
            // Predicated region
            $region69: #{tpu_custom_call.1} parent=67 // pred_check
              _
            $region70: #{tpu_custom_call.1} parent=67 // pred_check_branch
              %1948 = sbr.rel (0) target = $region72
            $region71: #{tpu_custom_call.1} parent=67 // pred_region
              // Predicated region
              $region91: #{tpu_custom_call.1} parent=71 // pred_check
                _
              $region92: #{tpu_custom_call.1} parent=71 // pred_check_branch
                %2022 = sbr.rel (0) target = $region94
              $region93: #{tpu_custom_call.1} parent=71 // pred_region
                %s2023 = sdiv.u32.pop %s1939, 13
                %s2024 = srem.u32.pop %s1939, 13
                // While loop
                $region95: #{tpu_custom_call.1} parent=93 // loop_pre_header
                  _
                $region96: #{tpu_custom_call.1} parent=93 // loop_header
                  %s2026 = sphi 0, %s2028
                  %p2027 = scmp.ge.s32.totalorder %s2026, %s2023
                  %s2031 = sphi 0, %s2062
                  %s2032 = sphi %s1932, %s2065
                  %s2033 = sphi %s1943, %s2066
                $region97: #{tpu_custom_call.1} parent=93 // loop_header_branch
                  %2030 = sbr.rel (%p2027) target = $region101
                $region98: #{tpu_custom_call.1} parent=93 // loop_body
                  %v2034 = vld [vmem:[%s2032] sm:$0xff]
                  %2035 = vst [vmem:[%s2033] sm:$0xff] %v2034
                  %v2036 = vld [vmem:[%s2032 + $0x8] sm:$0xff]
                  %2037 = vst [vmem:[%s2033 + $0x8] sm:$0xff] %v2036
                  %v2038 = vld [vmem:[%s2032 + $0x10] sm:$0xff]
                  %2039 = vst [vmem:[%s2033 + $0x10] sm:$0xff] %v2038
                  %v2040 = vld [vmem:[%s2032 + $0x18] sm:$0xff]
                  %2041 = vst [vmem:[%s2033 + $0x18] sm:$0xff] %v2040
                  %v2042 = vld [vmem:[%s2032 + $0x20] sm:$0xff]
                  %2043 = vst [vmem:[%s2033 + $0x20] sm:$0xff] %v2042
                  %v2044 = vld [vmem:[%s2032 + $0x28] sm:$0xff]
                  %2045 = vst [vmem:[%s2033 + $0x28] sm:$0xff] %v2044
                  %v2046 = vld [vmem:[%s2032 + $0x30] sm:$0xff]
                  %2047 = vst [vmem:[%s2033 + $0x30] sm:$0xff] %v2046
                  %v2048 = vld [vmem:[%s2032 + $0x38] sm:$0xff]
                  %2049 = vst [vmem:[%s2033 + $0x38] sm:$0xff] %v2048
                  %v2050 = vld [vmem:[%s2032 + $0x40] sm:$0xff]
                  %2051 = vst [vmem:[%s2033 + $0x40] sm:$0xff] %v2050
                  %v2052 = vld [vmem:[%s2032 + $0x48] sm:$0xff]
                  %2053 = vst [vmem:[%s2033 + $0x48] sm:$0xff] %v2052
                  %v2054 = vld [vmem:[%s2032 + $0x50] sm:$0xff]
                  %2055 = vst [vmem:[%s2033 + $0x50] sm:$0xff] %v2054
                  %v2056 = vld [vmem:[%s2032 + $0x58] sm:$0xff]
                  %2057 = vst [vmem:[%s2033 + $0x58] sm:$0xff] %v2056
                  %v2058 = vld [vmem:[%s2032 + $0x60] sm:$0xff]
                  %2059 = vst [vmem:[%s2033 + $0x60] sm:$0xff] %v2058
                  %s2060 = sadd.s32 1, %s2031
                  %p2061 = scmp.ge.s32.totalorder %s2060, %s2023
                  %s2062 = scalar_select %p2061, 0, %s2060
                  %s2063 = smul.u32 %s2062, 104
                  %s2064 = smul.u32 %s2062, 104
                  %s2065 = scalar_lea.vmem %s1932, %s2063 [#allocation7]
                  %s2066 = scalar_lea.vmem %s1943, %s2064
                $region99: #{tpu_custom_call.1} parent=93 // loop_footer
                  %s2028 = sadd.s32 %s2026, 1
                $region100: #{tpu_custom_call.1} parent=93 // loop_footer_branch
                  %2025 = sbr.rel target = $region96
                $region101: #{tpu_custom_call.1} parent=93 // loop_exit
                  _
                %s2067 = sdiv.u32.pop %s1939, 13
                %s2068 = srem.u32.pop %s1939, 13
                %s2069 = smul.u32 %s2067, 13
                %s2070 = smul.u32 8, %s2069
                %s2071 = scalar_lea.vmem %s1932, %s2070 [#allocation7]
                %s2072 = smul.u32 8, %s2069
                %s2073 = scalar_lea.vmem %s1943, %s2072
                // While loop
                $region102: #{tpu_custom_call.1} parent=93 // loop_pre_header
                  _
                $region103: #{tpu_custom_call.1} parent=93 // loop_header
                  %s2075 = sphi 0, %s2077
                  %p2076 = scmp.ge.s32.totalorder %s2075, %s2068
                  %s2080 = sphi 0, %s2087
                  %s2081 = sphi %s2071, %s2090
                  %s2082 = sphi %s2073, %s2091
                $region104: #{tpu_custom_call.1} parent=93 // loop_header_branch
                  %2079 = sbr.rel (%p2076) target = $region108
                $region105: #{tpu_custom_call.1} parent=93 // loop_body
                  %v2083 = vld [vmem:[%s2081] sm:$0xff]
                  %2084 = vst [vmem:[%s2082] sm:$0xff] %v2083
                  %s2085 = sadd.s32 1, %s2080
                  %p2086 = scmp.ge.s32.totalorder %s2085, %s2068
                  %s2087 = scalar_select %p2086, 0, %s2085
                  %s2088 = smul.u32 %s2087, 8
                  %s2089 = smul.u32 %s2087, 8
                  %s2090 = scalar_lea.vmem %s2071, %s2088 [#allocation7]
                  %s2091 = scalar_lea.vmem %s2073, %s2089
                $region106: #{tpu_custom_call.1} parent=93 // loop_footer
                  %s2077 = sadd.s32 %s2075, 1
                $region107: #{tpu_custom_call.1} parent=93 // loop_footer_branch
                  %2074 = sbr.rel target = $region103
                $region108: #{tpu_custom_call.1} parent=93 // loop_exit
                  _
              $region94: #{tpu_custom_call.1} parent=71 // pred_fallthru
                _
              // Predicated region
              $region109: #{tpu_custom_call.1} parent=71 // pred_check
                _
              $region110: #{tpu_custom_call.1} parent=71 // pred_check_branch
                %2093 = sbr.rel target = $region112
              $region111: #{tpu_custom_call.1} parent=71 // pred_region
                _
              $region112: #{tpu_custom_call.1} parent=71 // pred_fallthru
                _
            $region72: #{tpu_custom_call.1} parent=67 // pred_fallthru
              _
            // Predicated region
            $region73: #{tpu_custom_call.1} parent=67 // pred_check
              _
            $region74: #{tpu_custom_call.1} parent=67 // pred_check_branch
              %1950 = sbr.rel target = $region76
            $region75: #{tpu_custom_call.1} parent=67 // pred_region
              %s1952 = sdiv.u32.pop %s1939, 13
              %s1953 = srem.u32.pop %s1939, 13
              // While loop
              $region77: #{tpu_custom_call.1} parent=75 // loop_pre_header
                _
              $region78: #{tpu_custom_call.1} parent=75 // loop_header
                %s1955 = sphi 0, %s1957
                %p1956 = scmp.ge.s32.totalorder %s1955, %s1952
                %s1960 = sphi 0, %s1991
                %s1961 = sphi %s1932, %s1994
                %s1962 = sphi %s1943, %s1995
              $region79: #{tpu_custom_call.1} parent=75 // loop_header_branch
                %1959 = sbr.rel (%p1956) target = $region83
              $region80: #{tpu_custom_call.1} parent=75 // loop_body
                %v1963 = vld [vmem:[%s1961] sm:$0xff]
                %1964 = vst [vmem:[%s1962] sm:$0xff] %v1963
                %v1965 = vld [vmem:[%s1961 + $0x8] sm:$0xff]
                %1966 = vst [vmem:[%s1962 + $0x8] sm:$0xff] %v1965
                %v1967 = vld [vmem:[%s1961 + $0x10] sm:$0xff]
                %1968 = vst [vmem:[%s1962 + $0x10] sm:$0xff] %v1967
                %v1969 = vld [vmem:[%s1961 + $0x18] sm:$0xff]
                %1970 = vst [vmem:[%s1962 + $0x18] sm:$0xff] %v1969
                %v1971 = vld [vmem:[%s1961 + $0x20] sm:$0xff]
                %1972 = vst [vmem:[%s1962 + $0x20] sm:$0xff] %v1971
                %v1973 = vld [vmem:[%s1961 + $0x28] sm:$0xff]
                %1974 = vst [vmem:[%s1962 + $0x28] sm:$0xff] %v1973
                %v1975 = vld [vmem:[%s1961 + $0x30] sm:$0xff]
                %1976 = vst [vmem:[%s1962 + $0x30] sm:$0xff] %v1975
                %v1977 = vld [vmem:[%s1961 + $0x38] sm:$0xff]
                %1978 = vst [vmem:[%s1962 + $0x38] sm:$0xff] %v1977
                %v1979 = vld [vmem:[%s1961 + $0x40] sm:$0xff]
                %1980 = vst [vmem:[%s1962 + $0x40] sm:$0xff] %v1979
                %v1981 = vld [vmem:[%s1961 + $0x48] sm:$0xff]
                %1982 = vst [vmem:[%s1962 + $0x48] sm:$0xff] %v1981
                %v1983 = vld [vmem:[%s1961 + $0x50] sm:$0xff]
                %1984 = vst [vmem:[%s1962 + $0x50] sm:$0xff] %v1983
                %v1985 = vld [vmem:[%s1961 + $0x58] sm:$0xff]
                %1986 = vst [vmem:[%s1962 + $0x58] sm:$0xff] %v1985
                %v1987 = vld [vmem:[%s1961 + $0x60] sm:$0xff]
                %1988 = vst [vmem:[%s1962 + $0x60] sm:$0xff] %v1987
                %s1989 = sadd.s32 1, %s1960
                %p1990 = scmp.ge.s32.totalorder %s1989, %s1952
                %s1991 = scalar_select %p1990, 0, %s1989
                %s1992 = smul.u32 %s1991, 104
                %s1993 = smul.u32 %s1991, 104
                %s1994 = scalar_lea.vmem %s1932, %s1992 [#allocation7]
                %s1995 = scalar_lea.vmem %s1943, %s1993
              $region81: #{tpu_custom_call.1} parent=75 // loop_footer
                %s1957 = sadd.s32 %s1955, 1
              $region82: #{tpu_custom_call.1} parent=75 // loop_footer_branch
                %1954 = sbr.rel target = $region78
              $region83: #{tpu_custom_call.1} parent=75 // loop_exit
                _
              %s1996 = sdiv.u32.pop %s1939, 13
              %s1997 = srem.u32.pop %s1939, 13
              %s1998 = smul.u32 %s1996, 13
              %s1999 = smul.u32 8, %s1998
              %s2000 = scalar_lea.vmem %s1932, %s1999 [#allocation7]
              %s2001 = smul.u32 8, %s1998
              %s2002 = scalar_lea.vmem %s1943, %s2001
              // While loop
              $region84: #{tpu_custom_call.1} parent=75 // loop_pre_header
                _
              $region85: #{tpu_custom_call.1} parent=75 // loop_header
                %s2004 = sphi 0, %s2006
                %p2005 = scmp.ge.s32.totalorder %s2004, %s1997
                %s2009 = sphi 0, %s2016
                %s2010 = sphi %s2000, %s2019
                %s2011 = sphi %s2002, %s2020
              $region86: #{tpu_custom_call.1} parent=75 // loop_header_branch
                %2008 = sbr.rel (%p2005) target = $region90
              $region87: #{tpu_custom_call.1} parent=75 // loop_body
                %v2012 = vld [vmem:[%s2010] sm:$0xff]
                %2013 = vst [vmem:[%s2011] sm:$0xff] %v2012
                %s2014 = sadd.s32 1, %s2009
                %p2015 = scmp.ge.s32.totalorder %s2014, %s1997
                %s2016 = scalar_select %p2015, 0, %s2014
                %s2017 = smul.u32 %s2016, 8
                %s2018 = smul.u32 %s2016, 8
                %s2019 = scalar_lea.vmem %s2000, %s2017 [#allocation7]
                %s2020 = scalar_lea.vmem %s2002, %s2018
              $region88: #{tpu_custom_call.1} parent=75 // loop_footer
                %s2006 = sadd.s32 %s2004, 1
              $region89: #{tpu_custom_call.1} parent=75 // loop_footer_branch
                %2003 = sbr.rel target = $region85
              $region90: #{tpu_custom_call.1} parent=75 // loop_exit
                _
            $region76: #{tpu_custom_call.1} parent=67 // pred_fallthru
              _
          $region68: #{tpu_custom_call.1} parent=63 // pred_fallthru
            _
          %2094 = vnop
        $region64: #{tpu_custom_call.1} parent=51 // pred_fallthru
          _
      $region52: #{tpu_custom_call.1} parent=5 // pred_fallthru
        _
      %p2095 = scmp.le.s32.totalorder 2, %s18
      // Predicated region
      $region113: #{tpu_custom_call.1} parent=5 // pred_check
        %p2096 = pneg %p2095
      $region114: #{tpu_custom_call.1} parent=5 // pred_check_branch
        %2098 = sbr.rel (%p2096) target = $region116
      $region115: #{tpu_custom_call.1} parent=5 // pred_region
        %s2099 = ssub.s32 %s18, 2
        // Predicated region
        $region117: #{tpu_custom_call.1} parent=115 // pred_check
          %p2100 = pneg %p220
        $region118: #{tpu_custom_call.1} parent=115 // pred_check_branch
          %2102 = sbr.rel (%p2100) target = $region120
        $region119: #{tpu_custom_call.1} parent=115 // pred_region
          %s2103 = sand.u32 %s205, 1
          %s2104 = sand.u32 %s205, 1
          %s2105 = smul.addr %s2104, 104
          %s2106 = scalar_lea.vmem [#allocation7], %s2105
        $region120: #{tpu_custom_call.1} parent=115 // pred_fallthru
          _
      $region116: #{tpu_custom_call.1} parent=5 // pred_fallthru
        _
    $region6: #{tpu_custom_call.1} parent=1 // loop_footer
      %s22 = sadd.s32 1, %s18
    $region7: #{tpu_custom_call.1} parent=1 // loop_footer_branch
      %17 = sbr.rel target = $region3
    $region8: #{tpu_custom_call.1} parent=1 // loop_exit
      _
    %2107 = vsyncpa [#allocation4], 1
    %s2108 = scalar_lea.sflag [#allocation4], 1
    %2109 = vsyncpa %s2108, 1
    %2110 = vsyncpa [#allocation6], 1

</llo_original>
